<compile_context>
chip_gen: v6e
topology: v6e:2x2x1
jax: 0.10.0
libtpu: 0.0.40
codegen_flags: <defaults>
</compile_context>

<pallas_src>
import jax
import jax.numpy as jnp
from jax import lax
from jax.experimental import pallas as pl
from jax.experimental.pallas import tpu as pltpu

_LANES = 128


def _round_up(v, m):
    return (v + m - 1) // m * m


def _pick_strip_rows(H, W, Cp, Coutp, itemsize, budget_bytes=8 * 1024 * 1024):
    """Largest divisor of H whose per-strip VMEM working set fits the budget."""
    Wp = W + 2
    for hs in range(H, 0, -1):
        if H % hs:
            continue
        in_strip = 2 * (hs + 2) * Wp * Cp * itemsize           # double-buffered input
        f32_work = (hs + 2) * Wp * Cp * 4 + hs * W * Cp * 4    # one f32 cast copy + acc
        out_strip = 2 * hs * W * Coutp * itemsize              # double-buffered output
        if in_strip + f32_work + out_strip <= budget_bytes:
            return hs
    return 1


def depthwise_separable_conv(x_nchw, w_dw, w_pw, *, strip_rows=None, mxu_dtype=None):
    """x_nchw: (N, C, H, W); w_dw: (3, 3, C); w_pw: (C, Cout). Returns (N, Cout, H, W)."""
    N, C, H, W = x_nchw.shape
    Cout = w_pw.shape[1]

    Cp = _round_up(C, _LANES)        # lane-dense input channels (MXU K)
    Coutp = _round_up(Cout, _LANES)  # lane-dense output channels (MXU N, dense stores)
    Wp = W + 2                       # best perf when W is a multiple of 8 (aligned reshapes)

    if mxu_dtype is None:
        mxu_dtype = jnp.bfloat16 if x_nchw.dtype == jnp.bfloat16 else jnp.float32

    if strip_rows is None:
        strip_rows = _pick_strip_rows(H, W, Cp, Coutp, jnp.dtype(x_nchw.dtype).itemsize)
    Hs = strip_rows
    assert H % Hs == 0, "strip_rows must divide H"
    S = H // Hs

    # NCHW -> NHWC (channels on the lane axis); pad channels to a lane multiple and
    # H/W by 1 (the reference conv uses padding=1).  Zero-padded channels are exact:
    # their depthwise weights are zero and the padded matmul rows/cols contribute 0.
    x = jnp.transpose(x_nchw, (0, 2, 3, 1))
    x = jnp.pad(x, ((0, 0), (1, 1), (1, 1), (0, Cp - C)))
    wdw = jnp.pad(w_dw, ((0, 0), (0, 0), (0, Cp - C)))
    wpw = jnp.pad(w_pw, ((0, Cp - C), (0, Coutp - Cout)))

    def kernel(x_hbm, wdw_ref, wpw_ref, o_ref, xbuf, sem, acc_ref):
        n = pl.program_id(0)
        s = pl.program_id(1)
        slot = s % 2

        def strip_copy(batch, strip, buf_slot):
            return pltpu.make_async_copy(
                x_hbm.at[batch, pl.ds(strip * Hs, Hs + 2)],  # (Hs+2, W+2, Cp) halo'd strip
                xbuf.at[buf_slot],
                sem.at[buf_slot])

        # Prime the per-image DMA chain at the first strip of each image.
        @pl.when(s == 0)
        def _():
            strip_copy(n, 0, 0).start()

        # Wait for the current strip, then prefetch the next strip of this image.
        strip_copy(n, s, slot).wait()

        @pl.when(s + 1 < S)
        def _():
            strip_copy(n, s + 1, 1 - slot).start()

        # Cast the padded strip to f32 exactly once.
        xs = xbuf[slot].astype(jnp.float32)      # (Hs+2, W+2, Cp)
        wd = wdw_ref[...].astype(jnp.float32)    # (3, 3, Cp)

        # Depthwise 3x3 as 9 shifted multiply-accumulates (VPU) into VMEM scratch.
        # ky shifts are free row offsets; kx shifts slice the single f32 copy.
        for ky in range(3):
            part = (xs[ky:ky + Hs, 0:W, :] * wd[ky, 0, :]
                    + xs[ky:ky + Hs, 1:1 + W, :] * wd[ky, 1, :]
                    + xs[ky:ky + Hs, 2:2 + W, :] * wd[ky, 2, :])
            if ky == 0:
                acc_ref[...] = part
            else:
                acc_ref[...] += part

        # Pointwise 1x1 conv == (Hs*W, Cp) @ (Cp, Coutp) on the MXU.
        lhs = acc_ref[...].reshape(Hs * W, Cp).astype(mxu_dtype)
        rhs = wpw_ref[...].astype(mxu_dtype)
        out = jnp.dot(lhs, rhs, preferred_element_type=jnp.float32)
        o_ref[0] = out.reshape(Hs, W, Coutp).astype(o_ref.dtype)

    out_nhwc = pl.pallas_call(
        kernel,
        out_shape=jax.ShapeDtypeStruct((N, H, W, Coutp), x_nchw.dtype),
        grid_spec=pltpu.PrefetchScalarGridSpec(
            num_scalar_prefetch=0,
            grid=(N, S),
            in_specs=[
                pl.BlockSpec(memory_space=pl.ANY),                  # padded image in HBM
                pl.BlockSpec((3, 3, Cp), lambda n, s: (0, 0, 0)),   # depthwise weights
                pl.BlockSpec((Cp, Coutp), lambda n, s: (0, 0)),     # pointwise weights
            ],
            out_specs=pl.BlockSpec((1, Hs, W, Coutp), lambda n, s: (n, s, 0, 0)),
            scratch_shapes=[
                pltpu.VMEM((2, Hs + 2, Wp, Cp), x.dtype),   # double-buffered input strip
                pltpu.SemaphoreType.DMA((2,)),
                pltpu.VMEM((Hs, W, Cp), jnp.float32),       # depthwise accumulator
            ]),
        compiler_params=pltpu.CompilerParams(
            dimension_semantics=("parallel", "arbitrary"),
            vmem_limit_bytes=48 * 1024 * 1024),
    )(x, wdw, wpw)

    # Drop channel padding, back to NCHW to match the PyTorch interface.
    return jnp.transpose(out_nhwc[..., :Cout], (0, 3, 1, 2))


def _reference(x_nchw, w_dw, w_pw):
    """Pure-JAX reference using lax.conv_general_dilated (matches PyTorch Conv2d)."""
    C = x_nchw.shape[1]
    # depthwise: PyTorch weight (C, 1, 3, 3) == OIHW with feature_group_count=C
    w_dw_oihw = jnp.transpose(w_dw, (2, 0, 1))[:, None, :, :]
    dw = lax.conv_general_dilated(
        x_nchw, w_dw_oihw, window_strides=(1, 1), padding=((1, 1), (1, 1)),
        dimension_numbers=("NCHW", "OIHW", "NCHW"), feature_group_count=C)
    # pointwise: PyTorch weight (Cout, C, 1, 1)
    w_pw_oihw = jnp.transpose(w_pw, (1, 0))[:, :, None, None]
    return lax.conv_general_dilated(
        dw, w_pw_oihw, window_strides=(1, 1), padding=((0, 0), (0, 0)),
        dimension_numbers=("NCHW", "OIHW", "NCHW"))


if __name__ == "__main__":
    key = jax.random.PRNGKey(0)
    k_x, k_dw, k_pw = jax.random.split(key, 3)

    N, C, H, W = 2, 4, 16, 16
    Cout = 8

    x = jax.random.normal(k_x, (N, C, H, W), dtype=jnp.float32)
    w_dw = jax.random.normal(k_dw, (3, 3, C), dtype=jnp.float32) * 0.1
    w_pw = jax.random.normal(k_pw, (C, Cout), dtype=jnp.float32) * 0.1

    # f32 path (MXU operands stay f32 -> tight match vs the conv reference).
    # strip_rows=8 -> 2 strips per image, exercising the halo DMA + double buffer.
    run_f32 = jax.jit(lambda a, b, c: depthwise_separable_conv(a, b, c, strip_rows=8))
    out = jax.block_until_ready(run_f32(x, w_dw, w_pw))
    ref = _reference(x, w_dw, w_pw)
    assert out.shape == (N, Cout, H, W)
    assert jnp.allclose(out, ref, atol=1e-4, rtol=1e-4), "f32 mismatch vs reference"

    # bf16 path (bf16 MXU operands, f32 accumulate) vs a bf16-cast f32 reference.
    xb = x.astype(jnp.bfloat16)
    wdb = w_dw.astype(jnp.bfloat16)
    wpb = w_pw.astype(jnp.bfloat16)
    run_bf16 = jax.jit(lambda a, b, c: depthwise_separable_conv(a, b, c, strip_rows=8))
    out_b = jax.block_until_ready(run_bf16(xb, wdb, wpb))
    ref_b = _reference(xb.astype(jnp.float32), wdb.astype(jnp.float32),
                       wpb.astype(jnp.float32))
    assert out_b.dtype == jnp.bfloat16
    assert jnp.allclose(out_b.astype(jnp.float32), ref_b, atol=3e-2, rtol=3e-2), \
        "bf16 mismatch vs reference"

    print("KERNEL_OK")
</pallas_src>

<mosaic_0001>
module attributes {stable_mosaic.version = 11 : i64} {
  func.func @kernel(%arg0: i32, %arg1: i32, %arg2: memref<2x18x18x128xf32, #tpu.memory_space<any>>, %arg3: memref<3x3x128xf32, #tpu.memory_space<vmem>>, %arg4: memref<128x128xf32, #tpu.memory_space<vmem>>, %arg5: memref<1x8x16x128xf32, #tpu.memory_space<vmem>>, %arg6: memref<2x10x18x128xf32, #tpu.memory_space<vmem>>, %arg7: memref<2x!tpu.dma_semaphore, #tpu.memory_space<semaphore_mem>>, %arg8: memref<8x16x128xf32, #tpu.memory_space<vmem>>) attributes {dimension_semantics = [#tpu.dimension_semantics<parallel>, #tpu.dimension_semantics<arbitrary>], iteration_bounds = array<i64: 2, 2>, scalar_prefetch = 0 : i64, scratch_operands = 3 : i64, tpu.core_type = #tpu.core_type<tc>, window_params = [{}, {pipeline_mode = #tpu.pipeline_mode<synchronous>, transform_indices = @transform_1, window_bounds = array<i64: 3, 3, 128>}, {pipeline_mode = #tpu.pipeline_mode<synchronous>, transform_indices = @transform_2, window_bounds = array<i64: 128, 128>}, {transform_indices = @transform_3, window_bounds = array<i64: 1, 8, 16, 128>}]} {
    %c2_i32 = arith.constant 2 : i32
    %c0_i32 = arith.constant 0 : i32
    %0 = arith.cmpi eq, %c2_i32, %c0_i32 : i32
    %c1_i32 = arith.constant 1 : i32
    %1 = arith.select %0, %c1_i32, %c2_i32 : i32
    %2 = arith.remsi %arg1, %1 : i32
    %c0_i32_0 = arith.constant 0 : i32
    %3 = arith.cmpi ne, %2, %c0_i32_0 : i32
    %c0_i32_1 = arith.constant 0 : i32
    %4 = arith.cmpi slt, %2, %c0_i32_1 : i32
    %c0_i32_2 = arith.constant 0 : i32
    %5 = arith.cmpi slt, %1, %c0_i32_2 : i32
    %6 = arith.xori %4, %5 : i1
    %7 = arith.andi %6, %3 : i1
    %8 = arith.addi %2, %1 : i32
    %9 = arith.select %7, %8, %2 : i32
    %c0_i32_3 = arith.constant 0 : i32
    %10 = arith.cmpi eq, %arg1, %c0_i32_3 : i32
    %11 = arith.extui %10 : i1 to i32
    %c0_i32_4 = arith.constant 0 : i32
    %12 = arith.cmpi ne, %11, %c0_i32_4 : i32
    scf.if %12 {
      %c0_i32_42 = arith.constant 0 : i32
      %c0_i32_43 = arith.constant 0 : i32
      %c0_i32_44 = arith.constant 0 : i32
      %c0_i32_45 = arith.constant 0 : i32
      %c0_i32_46 = arith.constant 0 : i32
      %103 = tpu.memref_slice %arg2[%arg0, %c0_i32_44, %c0_i32_45, %c0_i32_46] : memref<2x18x18x128xf32, #tpu.memory_space<any>> -> memref<1x10x18x128xf32, #tpu.memory_space<any>>
      %104 = tpu.memref_squeeze %103 : memref<1x10x18x128xf32, #tpu.memory_space<any>> -> memref<10x18x128xf32, #tpu.memory_space<any>>
      %c0_i32_47 = arith.constant 0 : i32
      %c0_i32_48 = arith.constant 0 : i32
      %c0_i32_49 = arith.constant 0 : i32
      %105 = tpu.memref_slice %arg6[%c0_i32_42, %c0_i32_47, %c0_i32_48, %c0_i32_49] : memref<2x10x18x128xf32, #tpu.memory_space<vmem>> -> memref<1x10x18x128xf32, #tpu.memory_space<vmem>>
      %106 = tpu.memref_squeeze %105 : memref<1x10x18x128xf32, #tpu.memory_space<vmem>> -> memref<10x18x128xf32, #tpu.memory_space<vmem>>
      %107 = tpu.memref_slice %arg7[%c0_i32_43] : memref<2x!tpu.dma_semaphore, #tpu.memory_space<semaphore_mem>> -> memref<1x!tpu.dma_semaphore, #tpu.memory_space<semaphore_mem>>
      %108 = tpu.memref_squeeze %107 : memref<1x!tpu.dma_semaphore, #tpu.memory_space<semaphore_mem>> -> memref<!tpu.dma_semaphore, #tpu.memory_space<semaphore_mem>>
      tpu.enqueue_dma source(%104 : memref<10x18x128xf32, #tpu.memory_space<any>>) target(%106 : memref<10x18x128xf32, #tpu.memory_space<vmem>>) target_semaphore(%108 : memref<!tpu.dma_semaphore, #tpu.memory_space<semaphore_mem>>)
    } else {
    }
    %c8_i32 = arith.constant 8 : i32
    %13 = arith.muli %arg1, %c8_i32 : i32
    %c0_i32_5 = arith.constant 0 : i32
    %c0_i32_6 = arith.constant 0 : i32
    %14 = tpu.memref_slice %arg2[%arg0, %13, %c0_i32_5, %c0_i32_6] : memref<2x18x18x128xf32, #tpu.memory_space<any>> -> memref<1x10x18x128xf32, #tpu.memory_space<any>>
    %15 = tpu.memref_squeeze %14 : memref<1x10x18x128xf32, #tpu.memory_space<any>> -> memref<10x18x128xf32, #tpu.memory_space<any>>
    %c0_i32_7 = arith.constant 0 : i32
    %c0_i32_8 = arith.constant 0 : i32
    %c0_i32_9 = arith.constant 0 : i32
    %16 = tpu.memref_slice %arg6[%9, %c0_i32_7, %c0_i32_8, %c0_i32_9] : memref<2x10x18x128xf32, #tpu.memory_space<vmem>> -> memref<1x10x18x128xf32, #tpu.memory_space<vmem>>
    %17 = tpu.memref_squeeze %16 : memref<1x10x18x128xf32, #tpu.memory_space<vmem>> -> memref<10x18x128xf32, #tpu.memory_space<vmem>>
    %18 = tpu.memref_slice %arg7[%9] : memref<2x!tpu.dma_semaphore, #tpu.memory_space<semaphore_mem>> -> memref<1x!tpu.dma_semaphore, #tpu.memory_space<semaphore_mem>>
    %19 = tpu.memref_squeeze %18 : memref<1x!tpu.dma_semaphore, #tpu.memory_space<semaphore_mem>> -> memref<!tpu.dma_semaphore, #tpu.memory_space<semaphore_mem>>
    tpu.wait_dma2 semaphore(%19 : memref<!tpu.dma_semaphore, #tpu.memory_space<semaphore_mem>>) src(%15 : memref<10x18x128xf32, #tpu.memory_space<any>>) dst(%17 : memref<10x18x128xf32, #tpu.memory_space<vmem>>)
    %c1_i32_10 = arith.constant 1 : i32
    %20 = arith.addi %arg1, %c1_i32_10 : i32
    %c2_i32_11 = arith.constant 2 : i32
    %21 = arith.cmpi slt, %20, %c2_i32_11 : i32
    %22 = arith.extui %21 : i1 to i32
    %c0_i32_12 = arith.constant 0 : i32
    %23 = arith.cmpi ne, %22, %c0_i32_12 : i32
    scf.if %23 {
      %c1_i32_42 = arith.constant 1 : i32
      %103 = arith.addi %arg1, %c1_i32_42 : i32
      %c1_i32_43 = arith.constant 1 : i32
      %104 = arith.subi %c1_i32_43, %9 : i32
      %c8_i32_44 = arith.constant 8 : i32
      %105 = arith.muli %103, %c8_i32_44 : i32
      %c0_i32_45 = arith.constant 0 : i32
      %c0_i32_46 = arith.constant 0 : i32
      %106 = tpu.memref_slice %arg2[%arg0, %105, %c0_i32_45, %c0_i32_46] : memref<2x18x18x128xf32, #tpu.memory_space<any>> -> memref<1x10x18x128xf32, #tpu.memory_space<any>>
      %107 = tpu.memref_squeeze %106 : memref<1x10x18x128xf32, #tpu.memory_space<any>> -> memref<10x18x128xf32, #tpu.memory_space<any>>
      %c0_i32_47 = arith.constant 0 : i32
      %c0_i32_48 = arith.constant 0 : i32
      %c0_i32_49 = arith.constant 0 : i32
      %108 = tpu.memref_slice %arg6[%104, %c0_i32_47, %c0_i32_48, %c0_i32_49] : memref<2x10x18x128xf32, #tpu.memory_space<vmem>> -> memref<1x10x18x128xf32, #tpu.memory_space<vmem>>
      %109 = tpu.memref_squeeze %108 : memref<1x10x18x128xf32, #tpu.memory_space<vmem>> -> memref<10x18x128xf32, #tpu.memory_space<vmem>>
      %110 = tpu.memref_slice %arg7[%104] : memref<2x!tpu.dma_semaphore, #tpu.memory_space<semaphore_mem>> -> memref<1x!tpu.dma_semaphore, #tpu.memory_space<semaphore_mem>>
      %111 = tpu.memref_squeeze %110 : memref<1x!tpu.dma_semaphore, #tpu.memory_space<semaphore_mem>> -> memref<!tpu.dma_semaphore, #tpu.memory_space<semaphore_mem>>
      tpu.enqueue_dma source(%107 : memref<10x18x128xf32, #tpu.memory_space<any>>) target(%109 : memref<10x18x128xf32, #tpu.memory_space<vmem>>) target_semaphore(%111 : memref<!tpu.dma_semaphore, #tpu.memory_space<semaphore_mem>>)
    } else {
    }
    %24 = arith.index_cast %9 : i32 to index
    %c0 = arith.constant 0 : index
    %c0_13 = arith.constant 0 : index
    %c0_14 = arith.constant 0 : index
    %25 = vector.load %arg6[%24, %c0, %c0_13, %c0_14] : memref<2x10x18x128xf32, #tpu.memory_space<vmem>>, vector<1x10x18x128xf32>
    %26 = vector.shape_cast %25 : vector<1x10x18x128xf32> to vector<10x18x128xf32>
    %c0_15 = arith.constant 0 : index
    %c0_16 = arith.constant 0 : index
    %c0_17 = arith.constant 0 : index
    %27 = vector.load %arg3[%c0_15, %c0_16, %c0_17] : memref<3x3x128xf32, #tpu.memory_space<vmem>>, vector<3x3x128xf32>
    %28 = vector.extract_strided_slice %26 {offsets = [0, 0, 0], sizes = [8, 16, 128], strides = [1, 1, 1]} : vector<10x18x128xf32> to vector<8x16x128xf32>
    %29 = vector.extract_strided_slice %27 {offsets = [0, 0, 0], sizes = [1, 1, 128], strides = [1, 1, 1]} : vector<3x3x128xf32> to vector<1x1x128xf32>
    %30 = vector.shape_cast %29 : vector<1x1x128xf32> to vector<128xf32>
    %31 = vector.shape_cast %30 : vector<128xf32> to vector<1x1x128xf32>
    %32 = vector.broadcast %31 : vector<1x1x128xf32> to vector<8x16x128xf32>
    %33 = arith.mulf %28, %32 : vector<8x16x128xf32>
    %34 = vector.extract_strided_slice %26 {offsets = [0, 1, 0], sizes = [8, 16, 128], strides = [1, 1, 1]} : vector<10x18x128xf32> to vector<8x16x128xf32>
    %35 = vector.extract_strided_slice %27 {offsets = [0, 1, 0], sizes = [1, 1, 128], strides = [1, 1, 1]} : vector<3x3x128xf32> to vector<1x1x128xf32>
    %36 = vector.shape_cast %35 : vector<1x1x128xf32> to vector<128xf32>
    %37 = vector.shape_cast %36 : vector<128xf32> to vector<1x1x128xf32>
    %38 = vector.broadcast %37 : vector<1x1x128xf32> to vector<8x16x128xf32>
    %39 = arith.mulf %34, %38 : vector<8x16x128xf32>
    %40 = arith.addf %33, %39 : vector<8x16x128xf32>
    %41 = vector.extract_strided_slice %26 {offsets = [0, 2, 0], sizes = [8, 16, 128], strides = [1, 1, 1]} : vector<10x18x128xf32> to vector<8x16x128xf32>
    %42 = vector.extract_strided_slice %27 {offsets = [0, 2, 0], sizes = [1, 1, 128], strides = [1, 1, 1]} : vector<3x3x128xf32> to vector<1x1x128xf32>
    %43 = vector.shape_cast %42 : vector<1x1x128xf32> to vector<128xf32>
    %44 = vector.shape_cast %43 : vector<128xf32> to vector<1x1x128xf32>
    %45 = vector.broadcast %44 : vector<1x1x128xf32> to vector<8x16x128xf32>
    %46 = arith.mulf %41, %45 : vector<8x16x128xf32>
    %47 = arith.addf %40, %46 : vector<8x16x128xf32>
    %c0_18 = arith.constant 0 : index
    %c0_19 = arith.constant 0 : index
    %c0_20 = arith.constant 0 : index
    %48 = vector.load %arg8[%c0_18, %c0_19, %c0_20] : memref<8x16x128xf32, #tpu.memory_space<vmem>>, vector<8x16x128xf32>
    tpu.vector_store %arg8[%c0_18, %c0_19, %c0_20], %47 {strides = array<i32>} : memref<8x16x128xf32, #tpu.memory_space<vmem>>, vector<8x16x128xf32>,
    %49 = vector.extract_strided_slice %26 {offsets = [1, 0, 0], sizes = [8, 16, 128], strides = [1, 1, 1]} : vector<10x18x128xf32> to vector<8x16x128xf32>
    %50 = vector.extract_strided_slice %27 {offsets = [1, 0, 0], sizes = [1, 1, 128], strides = [1, 1, 1]} : vector<3x3x128xf32> to vector<1x1x128xf32>
    %51 = vector.shape_cast %50 : vector<1x1x128xf32> to vector<128xf32>
    %52 = vector.shape_cast %51 : vector<128xf32> to vector<1x1x128xf32>
    %53 = vector.broadcast %52 : vector<1x1x128xf32> to vector<8x16x128xf32>
    %54 = arith.mulf %49, %53 : vector<8x16x128xf32>
    %55 = vector.extract_strided_slice %26 {offsets = [1, 1, 0], sizes = [8, 16, 128], strides = [1, 1, 1]} : vector<10x18x128xf32> to vector<8x16x128xf32>
    %56 = vector.extract_strided_slice %27 {offsets = [1, 1, 0], sizes = [1, 1, 128], strides = [1, 1, 1]} : vector<3x3x128xf32> to vector<1x1x128xf32>
    %57 = vector.shape_cast %56 : vector<1x1x128xf32> to vector<128xf32>
    %58 = vector.shape_cast %57 : vector<128xf32> to vector<1x1x128xf32>
    %59 = vector.broadcast %58 : vector<1x1x128xf32> to vector<8x16x128xf32>
    %60 = arith.mulf %55, %59 : vector<8x16x128xf32>
    %61 = arith.addf %54, %60 : vector<8x16x128xf32>
    %62 = vector.extract_strided_slice %26 {offsets = [1, 2, 0], sizes = [8, 16, 128], strides = [1, 1, 1]} : vector<10x18x128xf32> to vector<8x16x128xf32>
    %63 = vector.extract_strided_slice %27 {offsets = [1, 2, 0], sizes = [1, 1, 128], strides = [1, 1, 1]} : vector<3x3x128xf32> to vector<1x1x128xf32>
    %64 = vector.shape_cast %63 : vector<1x1x128xf32> to vector<128xf32>
    %65 = vector.shape_cast %64 : vector<128xf32> to vector<1x1x128xf32>
    %66 = vector.broadcast %65 : vector<1x1x128xf32> to vector<8x16x128xf32>
    %67 = arith.mulf %62, %66 : vector<8x16x128xf32>
    %68 = arith.addf %61, %67 : vector<8x16x128xf32>
    %c0_21 = arith.constant 0 : index
    %c0_22 = arith.constant 0 : index
    %c0_23 = arith.constant 0 : index
    %69 = vector.load %arg8[%c0_21, %c0_22, %c0_23] : memref<8x16x128xf32, #tpu.memory_space<vmem>>, vector<8x16x128xf32>
    %70 = arith.addf %69, %68 : vector<8x16x128xf32>
    %c0_24 = arith.constant 0 : index
    %c0_25 = arith.constant 0 : index
    %c0_26 = arith.constant 0 : index
    %71 = vector.load %arg8[%c0_24, %c0_25, %c0_26] : memref<8x16x128xf32, #tpu.memory_space<vmem>>, vector<8x16x128xf32>
    tpu.vector_store %arg8[%c0_24, %c0_25, %c0_26], %70 {strides = array<i32>} : memref<8x16x128xf32, #tpu.memory_space<vmem>>, vector<8x16x128xf32>,
    %72 = vector.extract_strided_slice %26 {offsets = [2, 0, 0], sizes = [8, 16, 128], strides = [1, 1, 1]} : vector<10x18x128xf32> to vector<8x16x128xf32>
    %73 = vector.extract_strided_slice %27 {offsets = [2, 0, 0], sizes = [1, 1, 128], strides = [1, 1, 1]} : vector<3x3x128xf32> to vector<1x1x128xf32>
    %74 = vector.shape_cast %73 : vector<1x1x128xf32> to vector<128xf32>
    %75 = vector.shape_cast %74 : vector<128xf32> to vector<1x1x128xf32>
    %76 = vector.broadcast %75 : vector<1x1x128xf32> to vector<8x16x128xf32>
    %77 = arith.mulf %72, %76 : vector<8x16x128xf32>
    %78 = vector.extract_strided_slice %26 {offsets = [2, 1, 0], sizes = [8, 16, 128], strides = [1, 1, 1]} : vector<10x18x128xf32> to vector<8x16x128xf32>
    %79 = vector.extract_strided_slice %27 {offsets = [2, 1, 0], sizes = [1, 1, 128], strides = [1, 1, 1]} : vector<3x3x128xf32> to vector<1x1x128xf32>
    %80 = vector.shape_cast %79 : vector<1x1x128xf32> to vector<128xf32>
    %81 = vector.shape_cast %80 : vector<128xf32> to vector<1x1x128xf32>
    %82 = vector.broadcast %81 : vector<1x1x128xf32> to vector<8x16x128xf32>
    %83 = arith.mulf %78, %82 : vector<8x16x128xf32>
    %84 = arith.addf %77, %83 : vector<8x16x128xf32>
    %85 = vector.extract_strided_slice %26 {offsets = [2, 2, 0], sizes = [8, 16, 128], strides = [1, 1, 1]} : vector<10x18x128xf32> to vector<8x16x128xf32>
    %86 = vector.extract_strided_slice %27 {offsets = [2, 2, 0], sizes = [1, 1, 128], strides = [1, 1, 1]} : vector<3x3x128xf32> to vector<1x1x128xf32>
    %87 = vector.shape_cast %86 : vector<1x1x128xf32> to vector<128xf32>
    %88 = vector.shape_cast %87 : vector<128xf32> to vector<1x1x128xf32>
    %89 = vector.broadcast %88 : vector<1x1x128xf32> to vector<8x16x128xf32>
    %90 = arith.mulf %85, %89 : vector<8x16x128xf32>
    %91 = arith.addf %84, %90 : vector<8x16x128xf32>
    %c0_27 = arith.constant 0 : index
    %c0_28 = arith.constant 0 : index
    %c0_29 = arith.constant 0 : index
    %92 = vector.load %arg8[%c0_27, %c0_28, %c0_29] : memref<8x16x128xf32, #tpu.memory_space<vmem>>, vector<8x16x128xf32>
    %93 = arith.addf %92, %91 : vector<8x16x128xf32>
    %c0_30 = arith.constant 0 : index
    %c0_31 = arith.constant 0 : index
    %c0_32 = arith.constant 0 : index
    %94 = vector.load %arg8[%c0_30, %c0_31, %c0_32] : memref<8x16x128xf32, #tpu.memory_space<vmem>>, vector<8x16x128xf32>
    tpu.vector_store %arg8[%c0_30, %c0_31, %c0_32], %93 {strides = array<i32>} : memref<8x16x128xf32, #tpu.memory_space<vmem>>, vector<8x16x128xf32>,
    %c0_33 = arith.constant 0 : index
    %c0_34 = arith.constant 0 : index
    %c0_35 = arith.constant 0 : index
    %95 = vector.load %arg8[%c0_33, %c0_34, %c0_35] : memref<8x16x128xf32, #tpu.memory_space<vmem>>, vector<8x16x128xf32>
    %96 = vector.shape_cast %95 : vector<8x16x128xf32> to vector<128x128xf32>
    %c0_36 = arith.constant 0 : index
    %c0_37 = arith.constant 0 : index
    %97 = vector.load %arg4[%c0_36, %c0_37] : memref<128x128xf32, #tpu.memory_space<vmem>>, vector<128x128xf32>
    %cst = arith.constant dense<0.000000e+00> : vector<128x128xf32>
    %98 = tpu.matmul %96, %97, %cst {dimension_numbers = #tpu.dot_dimension_numbers<[1], [0], [0], [1], [0, 0, 1, 1], [], []>} : vector<128x128xf32>, vector<128x128xf32>, vector<128x128xf32> -> vector<128x128xf32>
    %99 = vector.shape_cast %98 : vector<128x128xf32> to vector<8x16x128xf32>
    %c0_38 = arith.constant 0 : index
    %c0_39 = arith.constant 0 : index
    %c0_40 = arith.constant 0 : index
    %c0_41 = arith.constant 0 : index
    %100 = vector.load %arg5[%c0_38, %c0_39, %c0_40, %c0_41] : memref<1x8x16x128xf32, #tpu.memory_space<vmem>>, vector<1x8x16x128xf32>
    %101 = vector.shape_cast %100 : vector<1x8x16x128xf32> to vector<8x16x128xf32>
    %102 = vector.shape_cast %99 : vector<8x16x128xf32> to vector<1x8x16x128xf32>
    tpu.vector_store %arg5[%c0_38, %c0_39, %c0_40, %c0_41], %102 {strides = array<i32>} : memref<1x8x16x128xf32, #tpu.memory_space<vmem>>, vector<1x8x16x128xf32>,
    return
  }
  func.func @transform_1(%arg0: i32, %arg1: i32) -> (i32, i32, i32) {
    %c0_i32 = arith.constant 0 : i32
    %c0_i32_0 = arith.constant 0 : i32
    %c0_i32_1 = arith.constant 0 : i32
    %c0_i32_2 = arith.constant 0 : i32
    return %c0_i32, %c0_i32_0, %c0_i32_1 : i32, i32, i32
  }
  func.func @transform_2(%arg0: i32, %arg1: i32) -> (i32, i32) {
    %c0_i32 = arith.constant 0 : i32
    %c0_i32_0 = arith.constant 0 : i32
    %c0_i32_1 = arith.constant 0 : i32
    return %c0_i32, %c0_i32_0 : i32, i32
  }
  func.func @transform_3(%arg0: i32, %arg1: i32) -> (i32, i32, i32, i32) {
    %c0_i32 = arith.constant 0 : i32
    %c0_i32_0 = arith.constant 0 : i32
    %c0_i32_1 = arith.constant 0 : i32
    return %arg0, %arg1, %c0_i32, %c0_i32_0 : i32, i32, i32, i32
  }
}

</mosaic_0001>

<llo_original>
// kernel: _lambda_.1
$region0: #{_lambda_.1}
  #allocation0 [shape = 'u32[]', space=smem, size = 0x4, offset = 0x4, fixed_abs, tag = 'smem constant byte address 0x4 - core index']
  #allocation1 [shape = 'u32[144,128]{1,0:T(1,128)}', space=vmem, size = 0x12000, scoped, tag = 'internal scratch']
  #allocation2 [shape = 'f32[2,10,18,128]{3,2,1,0:T(8,128)}', space=vmem, size = 0x3c000, scoped, tag = 'scratch operand']
  #allocation3 [shape = 's32[2]{0}', space=sflag, size = 0x8, scoped, tag = 'scratch operand']
  #allocation4 [shape = 'f32[8,16,128]{2,1,0:T(8,128)}', space=vmem, size = 0x10000, scoped, tag = 'scratch operand']
  #allocation5 [shape = 's32[]', space=sflag, size = 0x4, offset = 0, fixed_abs, tag = 'sflag constant byte address 0x0 - dummy sync flag']
  #allocation6 [shape = 's32[]', space=sflag, size = 0x4, offset = 0, fixed_abs, tag = 'sflag constant byte address 0x0 - dummy sync flag']
  %s0 = inlined_call_operand.vmem [shape: f32[2,18,18,128], index: 0, kind: input, shape index: {}]
  %s1 = inlined_call_operand.vmem [shape: f32[3,3,128], index: 1, kind: input, shape index: {}]
  %s2 = inlined_call_operand.vmem [shape: f32[128,128], index: 2, kind: input, shape index: {}]
  %s3 = inlined_call_operand.vmem [shape: f32[2,16,16,128], index: 3, kind: output, shape index: {}]
  %s4 = sld [smem:[#allocation0]]
  $region123: #{_lambda_.1} parent=0
    _
  %s6 = ssub.s32 1, %s4
  %s7 = scalar_select 0, %s6, %s4
  loop: start=0, step=1, limit=6
  $region2: #{_lambda_.1} parent=0 // loop_pre_header
    _
  $region3: #{_lambda_.1} parent=0 // loop_header
    %s9 = sphi 0, %s13
    %p10 = scmp.ge.s32.totalorder %s9, 6
    %s16 = sphi 0, %s28
    %s17 = sphi 0, %s24
    %s18 = sphi 0, %s16
    %s19 = sphi 0, %s17
    %s20 = sphi 0, %s18
    %s21 = sphi 0, %s19
    %s29 = sphi 0, %s29
    %s31 = sphi 0, %s29
    %s32 = sphi 0, %s31
    %s46 = sphi 0, %s32
    %s50 = sphi 0, %s50
    %s52 = sphi 0, %s50
    %s53 = sphi 0, %s52
    %s67 = sphi 0, %s53
    %s75 = sphi 0, %s77
    %s78 = sphi 0, %s75
    %s79 = sphi 0, %s78
    %s95 = sphi 0, %s79
  $region4: #{_lambda_.1} parent=0 // loop_header_branch
    %12 = sbr.rel (%p10) target = $region8
  $region5: #{_lambda_.1} parent=0 // loop_body
    %s14 = ssub.s32 %s9, 1
    %s15 = ssub.s32 %s9, 2
    %s22 = sadd.s32 1, %s17
    %p23 = scmp.ge.s32.totalorder %s22, 2
    %s24 = scalar_select %p23, 0, %s22
    %s25 = sadd.s32 1, %s16
    %s26 = scalar_select %p23, %s25, %s16
    %p27 = scmp.ge.s32.totalorder %s26, 2
    %s28 = scalar_select %p27, 0, %s26
    %s30 = sadd.s32 %s29, 1
    %p33 = scmp.eq.s32.totalorder %s9, 3
    %p34 = scmp.ne.s32.totalorder %s29, %s31
    %p35 = scmp.eq.s32.totalorder %s9, 0
    %p36 = por %p34, %p35
    %p37 = scmp.ne.s32.totalorder %s29, %s31
    %p38 = scmp.eq.s32.totalorder %s14, 3
    %p39 = por %p37, %p38
    %p40 = scmp.ne.s32.totalorder %s31, %s32
    %p41 = scmp.eq.s32.totalorder %s14, 0
    %p42 = por %p40, %p41
    %p43 = scmp.ne.s32.totalorder %s31, %s32
    %p44 = scmp.eq.s32.totalorder %s15, 3
    %p45 = por %p43, %p44
    %p47 = scmp.ne.s32.totalorder %s32, %s46
    %p48 = scmp.eq.s32.totalorder %s15, 0
    %p49 = por %p47, %p48
    %s51 = sadd.s32 %s50, 1
    %p54 = scmp.eq.s32.totalorder %s9, 3
    %p55 = scmp.ne.s32.totalorder %s50, %s52
    %p56 = scmp.eq.s32.totalorder %s9, 0
    %p57 = por %p55, %p56
    %p58 = scmp.ne.s32.totalorder %s50, %s52
    %p59 = scmp.eq.s32.totalorder %s14, 3
    %p60 = por %p58, %p59
    %p61 = scmp.ne.s32.totalorder %s52, %s53
    %p62 = scmp.eq.s32.totalorder %s14, 0
    %p63 = por %p61, %p62
    %p64 = scmp.ne.s32.totalorder %s52, %s53
    %p65 = scmp.eq.s32.totalorder %s15, 3
    %p66 = por %p64, %p65
    %p68 = scmp.ne.s32.totalorder %s53, %s67
    %p69 = scmp.eq.s32.totalorder %s15, 0
    %p70 = por %p68, %p69
    %s71 = ssub.s32 %s16, %s28
    %s72 = ssub.s32 %s17, %s24
    %s73 = sor.u32 %s71, %s72
    %p74 = scmp.eq.s32.totalorder %s73, 0
    %s76 = sadd.s32 %s75, 1
    %s77 = scalar_select %p74, %s75, %s76
    %p80 = pneg %p74
    %p81 = scmp.eq.s32.totalorder %s9, 3
    %p82 = por %p80, %p81
    %p83 = scmp.ne.s32.totalorder %s75, %s78
    %p84 = scmp.eq.s32.totalorder %s9, 0
    %p85 = por %p83, %p84
    %p86 = scmp.ne.s32.totalorder %s75, %s78
    %p87 = scmp.eq.s32.totalorder %s14, 3
    %p88 = por %p86, %p87
    %p89 = scmp.ne.s32.totalorder %s78, %s79
    %p90 = scmp.eq.s32.totalorder %s14, 0
    %p91 = por %p89, %p90
    %p92 = scmp.ne.s32.totalorder %s78, %s79
    %p93 = scmp.eq.s32.totalorder %s15, 3
    %p94 = por %p92, %p93
    %p96 = scmp.ne.s32.totalorder %s79, %s95
    %p97 = scmp.eq.s32.totalorder %s15, 0
    %p98 = por %p96, %p97
    %p99 = scmp.le.s32.totalorder 1, %s9
    %p100 = scmp.lt.s32.totalorder %s9, 5
    %p101 = pnand %p99, %p100
    %p102 = pneg %p101
    // Predicated region
    $region9: #{_lambda_.1} parent=5 // pred_check
      _
    $region10: #{_lambda_.1} parent=5 // pred_check_branch
      %104 = sbr.rel (%p101) target = $region12
    $region11: #{_lambda_.1} parent=5 // pred_region
      %s105 = ssub.s32 %s9, 1
      // Predicated region
      $region13: #{_lambda_.1} parent=11 // pred_check
        %p106 = pneg %p42
      $region14: #{_lambda_.1} parent=11 // pred_check_branch
        %108 = sbr.rel (%p106) target = $region16
      $region15: #{_lambda_.1} parent=11 // pred_region
        _
      $region16: #{_lambda_.1} parent=11 // pred_fallthru
        _
      // Predicated region
      $region17: #{_lambda_.1} parent=11 // pred_check
        %p109 = pneg %p63
      $region18: #{_lambda_.1} parent=11 // pred_check_branch
        %111 = sbr.rel (%p109) target = $region20
      $region19: #{_lambda_.1} parent=11 // pred_region
        _
      $region20: #{_lambda_.1} parent=11 // pred_fallthru
        _
    $region12: #{_lambda_.1} parent=5 // pred_fallthru
      _
    %p112 = scmp.lt.s32.totalorder %s9, 4
    // Predicated region
    $region21: #{_lambda_.1} parent=5 // pred_check
      %p113 = pneg %p112
    $region22: #{_lambda_.1} parent=5 // pred_check_branch
      %115 = sbr.rel (%p113) target = $region24
    $region23: #{_lambda_.1} parent=5 // pred_region
      _
    $region24: #{_lambda_.1} parent=5 // pred_fallthru
      _
    %p116 = scmp.le.s32.totalorder 1, %s9
    %p117 = scmp.lt.s32.totalorder %s9, 5
    %p118 = pnand %p116, %p117
    %p119 = pneg %p118
    // Predicated region
    $region25: #{_lambda_.1} parent=5 // pred_check
      _
    $region26: #{_lambda_.1} parent=5 // pred_check_branch
      %121 = sbr.rel (%p118) target = $region28
    $region27: #{_lambda_.1} parent=5 // pred_region
      %s122 = ssub.s32 %s9, 1
      %p123 = pneg %p42
      %p124 = pneg %p39
      %p125 = pneg %p63
      %p126 = pneg %p60
      %p127 = pneg %p91
      %p128 = pneg %p88
      %s129 = smul.u32 8, %s19
      %p130 = scmp.lt.s32.totalorder %s18, 1
      %s131 = scalar_select %p130, %s18, 1
      %p132 = scmp.lt.s32.totalorder %s129, 15
      %s133 = scalar_select %p132, %s129, 15
      %s134 = smul.addr %s133, 2
      %s135 = smul.addr %s131, 32
      %s136 = sadd.s32 %s134, %s135
      %s137 = smul.addr %s136, 8
      %s138 = scalar_lea.vmem %s3, %s137
      %s139 = smul.u32 8, %s19
      %p140 = scmp.lt.s32.totalorder %s18, 1
      %s141 = scalar_select %p140, %s18, 1
      %p142 = scmp.lt.s32.totalorder %s139, 15
      %s143 = scalar_select %p142, %s139, 15
      %s144 = smul.addr %s143, 2
      %s145 = smul.addr %s141, 32
      %s146 = sadd.s32 %s144, %s145
      %s147 = smul.addr %s146, 8
      %s148 = scalar_lea.vmem %s3, %s147
      %s149 = smul.u32 8, %s19
      %p150 = scmp.lt.s32.totalorder %s19, 0
      %s151 = ssub.s32 0, %s19
      %s152 = scalar_select %p150, %s151, %s19
      %s153 = sand.u32 %s152, 1
      %s154 = ssub.s32 0, %s153
      %s155 = scalar_select %p150, %s154, %s153
      %p156 = scmp.ne.s32.totalorder %s155, 0
      %p157 = scmp.lt.s32.totalorder %s155, 0
      %p158 = pnand %p157, %p156
      %p159 = pneg %p158
      %s160 = sadd.s32 %s155, 2
      %s161 = scalar_select %p159, %s160, %s155
      %p162 = scmp.eq.s32.totalorder %s19, 0
      // Predicated region
      $region29: #{_lambda_.1} parent=27 // pred_check
        %p163 = pneg %p162
      $region30: #{_lambda_.1} parent=27 // pred_check_branch
        %165 = sbr.rel (%p163) target = $region32
      $region31: #{_lambda_.1} parent=27 // pred_region
        %s166 = smul.u32 %s18, 432
        %s167 = scalar_lea.vmem %s0, %s166
        %p169 = scmp.lt.u32.totalorder 18, 8
        %p170 = pneg %p169
        // Predicated region
        $region33: #{_lambda_.1} parent=31 // pred_check
          _
        $region34: #{_lambda_.1} parent=31 // pred_check_branch
          %172 = sbr.rel (%p169) target = $region36
        $region35: #{_lambda_.1} parent=31 // pred_region
          %s206 = sand.u32 18, 7
          %p207 = scmp.eq.s32.totalorder %s206, 0
          %p208 = pneg %p207
          // Predicated region
          $region48: #{_lambda_.1} parent=35 // pred_check
            _
          $region49: #{_lambda_.1} parent=35 // pred_check_branch
            %210 = sbr.rel (%p207) target = $region51
          $region50: #{_lambda_.1} parent=35 // pred_region
            %s211 = sand.u32 18, 7
            %s212 = ssub.s32 18, %s211
            %s213 = scalar_lea.vmem %s167, %s212
            %s214 = ssub.s32 18, %s211
            %s215 = scalar_lea.vmem [#allocation2], %s214
            loop: start=0, step=1, limit=1
            $region52: #{_lambda_.1} parent=50 // loop_pre_header
              _
            $region53: #{_lambda_.1} parent=50 // loop_header
              %s217 = sphi 0, %s221
              %p218 = scmp.ge.s32.totalorder %s217, 1
              %s222 = sphi %s167, %s167
              %s223 = sphi [#allocation2], [#allocation2]
            $region54: #{_lambda_.1} parent=50 // loop_header_branch
              %220 = sbr.rel (%p218) target = $region58
            $region55: #{_lambda_.1} parent=50 // loop_body
              %v224 = vld [vmem:[%s222] sm:$0xff]
              %225 = vst [vmem:[%s223] sm:$0xff] %v224
              %v226 = vld [vmem:[%s222 + $0x8] sm:$0xff]
              %227 = vst [vmem:[%s223 + $0x8] sm:$0xff] %v226
              %v228 = vld [vmem:[%s222 + $0x18] sm:$0xff]
              %229 = vst [vmem:[%s223 + $0x18] sm:$0xff] %v228
              %v230 = vld [vmem:[%s222 + $0x20] sm:$0xff]
              %231 = vst [vmem:[%s223 + $0x20] sm:$0xff] %v230
              %v232 = vld [vmem:[%s222 + $0x30] sm:$0xff]
              %233 = vst [vmem:[%s223 + $0x30] sm:$0xff] %v232
              %v234 = vld [vmem:[%s222 + $0x38] sm:$0xff]
              %235 = vst [vmem:[%s223 + $0x38] sm:$0xff] %v234
              %v236 = vld [vmem:[%s222 + $0x48] sm:$0xff]
              %237 = vst [vmem:[%s223 + $0x48] sm:$0xff] %v236
              %v238 = vld [vmem:[%s222 + $0x50] sm:$0xff]
              %239 = vst [vmem:[%s223 + $0x50] sm:$0xff] %v238
              %v240 = vld [vmem:[%s222 + $0x60] sm:$0xff]
              %241 = vst [vmem:[%s223 + $0x60] sm:$0xff] %v240
              %v242 = vld [vmem:[%s222 + $0x68] sm:$0xff]
              %243 = vst [vmem:[%s223 + $0x68] sm:$0xff] %v242
              %v244 = vld [vmem:[%s222 + $0x78] sm:$0xff]
              %245 = vst [vmem:[%s223 + $0x78] sm:$0xff] %v244
              %v246 = vld [vmem:[%s222 + $0x80] sm:$0xff]
              %247 = vst [vmem:[%s223 + $0x80] sm:$0xff] %v246
              %v248 = vld [vmem:[%s222 + $0x90] sm:$0xff]
              %249 = vst [vmem:[%s223 + $0x90] sm:$0xff] %v248
              %v250 = vld [vmem:[%s222 + $0x98] sm:$0xff]
              %251 = vst [vmem:[%s223 + $0x98] sm:$0xff] %v250
              %v252 = vld [vmem:[%s222 + $0xa8] sm:$0xff]
              %253 = vst [vmem:[%s223 + $0xa8] sm:$0xff] %v252
              %v254 = vld [vmem:[%s222 + $0xb0] sm:$0xff]
              %255 = vst [vmem:[%s223 + $0xb0] sm:$0xff] %v254
              %v256 = vld [vmem:[%s222 + $0xc0] sm:$0xff]
              %257 = vst [vmem:[%s223 + $0xc0] sm:$0xff] %v256
              %v258 = vld [vmem:[%s222 + $0xc8] sm:$0xff]
              %259 = vst [vmem:[%s223 + $0xc8] sm:$0xff] %v258
              %v260 = vld [vmem:[%s222 + $0xd8] sm:$0xff]
              %261 = vst [vmem:[%s223 + $0xd8] sm:$0xff] %v260
              %v262 = vld [vmem:[%s222 + $0xe0] sm:$0xff]
              %263 = vst [vmem:[%s223 + $0xe0] sm:$0xff] %v262
            $region56: #{_lambda_.1} parent=50 // loop_footer
              %s221 = sadd.s32 1, %s217
            $region57: #{_lambda_.1} parent=50 // loop_footer_branch
              %216 = sbr.rel target = $region53
            $region58: #{_lambda_.1} parent=50 // loop_exit
              _
            %s264 = sshll.u32 1, %s211
            %s265 = ssub.s32 %s264, 1
            loop: start=0, step=1, limit=1
            $region59: #{_lambda_.1} parent=50 // loop_pre_header
              _
            $region60: #{_lambda_.1} parent=50 // loop_header
              %s267 = sphi 0, %s271
              %p268 = scmp.ge.s32.totalorder %s267, 1
              %s272 = sphi %s213, %s213
              %s273 = sphi %s215, %s215
            $region61: #{_lambda_.1} parent=50 // loop_header_branch
              %270 = sbr.rel (%p268) target = $region65
            $region62: #{_lambda_.1} parent=50 // loop_body
              %v274 = vld [vmem:[%s272] sm:%s265]
              %275 = vst [vmem:[%s273] sm:%s265] %v274
              %v276 = vld [vmem:[%s272 + $0x18] sm:%s265]
              %277 = vst [vmem:[%s273 + $0x18] sm:%s265] %v276
              %v278 = vld [vmem:[%s272 + $0x30] sm:%s265]
              %279 = vst [vmem:[%s273 + $0x30] sm:%s265] %v278
              %v280 = vld [vmem:[%s272 + $0x48] sm:%s265]
              %281 = vst [vmem:[%s273 + $0x48] sm:%s265] %v280
              %v282 = vld [vmem:[%s272 + $0x60] sm:%s265]
              %283 = vst [vmem:[%s273 + $0x60] sm:%s265] %v282
              %v284 = vld [vmem:[%s272 + $0x78] sm:%s265]
              %285 = vst [vmem:[%s273 + $0x78] sm:%s265] %v284
              %v286 = vld [vmem:[%s272 + $0x90] sm:%s265]
              %287 = vst [vmem:[%s273 + $0x90] sm:%s265] %v286
              %v288 = vld [vmem:[%s272 + $0xa8] sm:%s265]
              %289 = vst [vmem:[%s273 + $0xa8] sm:%s265] %v288
              %v290 = vld [vmem:[%s272 + $0xc0] sm:%s265]
              %291 = vst [vmem:[%s273 + $0xc0] sm:%s265] %v290
              %v292 = vld [vmem:[%s272 + $0xd8] sm:%s265]
              %293 = vst [vmem:[%s273 + $0xd8] sm:%s265] %v292
            $region63: #{_lambda_.1} parent=50 // loop_footer
              %s271 = sadd.s32 1, %s267
            $region64: #{_lambda_.1} parent=50 // loop_footer_branch
              %266 = sbr.rel target = $region60
            $region65: #{_lambda_.1} parent=50 // loop_exit
              _
          $region51: #{_lambda_.1} parent=35 // pred_fallthru
            _
        $region36: #{_lambda_.1} parent=31 // pred_fallthru
          _
        // Predicated region
        $region37: #{_lambda_.1} parent=31 // pred_check
          %p173 = pneg %p169
        $region38: #{_lambda_.1} parent=31 // pred_check_branch
          %175 = sbr.rel (%p173) target = $region40
        $region39: #{_lambda_.1} parent=31 // pred_region
          %s176 = sshll.u32 1, 18
          %s177 = ssub.s32 %s176, 1
          loop: start=0, step=1, limit=1
          $region41: #{_lambda_.1} parent=39 // loop_pre_header
            _
          $region42: #{_lambda_.1} parent=39 // loop_header
            %s179 = sphi 0, %s183
            %p180 = scmp.ge.s32.totalorder %s179, 1
            %s184 = sphi %s167, %s167
            %s185 = sphi [#allocation2], [#allocation2]
          $region43: #{_lambda_.1} parent=39 // loop_header_branch
            %182 = sbr.rel (%p180) target = $region47
          $region44: #{_lambda_.1} parent=39 // loop_body
            %v186 = vld [vmem:[%s184] sm:%s177]
            %187 = vst [vmem:[%s185] sm:%s177] %v186
            %v188 = vld [vmem:[%s184 + $0x18] sm:%s177]
            %189 = vst [vmem:[%s185 + $0x18] sm:%s177] %v188
            %v190 = vld [vmem:[%s184 + $0x30] sm:%s177]
            %191 = vst [vmem:[%s185 + $0x30] sm:%s177] %v190
            %v192 = vld [vmem:[%s184 + $0x48] sm:%s177]
            %193 = vst [vmem:[%s185 + $0x48] sm:%s177] %v192
            %v194 = vld [vmem:[%s184 + $0x60] sm:%s177]
            %195 = vst [vmem:[%s185 + $0x60] sm:%s177] %v194
            %v196 = vld [vmem:[%s184 + $0x78] sm:%s177]
            %197 = vst [vmem:[%s185 + $0x78] sm:%s177] %v196
            %v198 = vld [vmem:[%s184 + $0x90] sm:%s177]
            %199 = vst [vmem:[%s185 + $0x90] sm:%s177] %v198
            %v200 = vld [vmem:[%s184 + $0xa8] sm:%s177]
            %201 = vst [vmem:[%s185 + $0xa8] sm:%s177] %v200
            %v202 = vld [vmem:[%s184 + $0xc0] sm:%s177]
            %203 = vst [vmem:[%s185 + $0xc0] sm:%s177] %v202
            %v204 = vld [vmem:[%s184 + $0xd8] sm:%s177]
            %205 = vst [vmem:[%s185 + $0xd8] sm:%s177] %v204
          $region45: #{_lambda_.1} parent=39 // loop_footer
            %s183 = sadd.s32 1, %s179
          $region46: #{_lambda_.1} parent=39 // loop_footer_branch
            %178 = sbr.rel target = $region42
          $region47: #{_lambda_.1} parent=39 // loop_exit
            _
        $region40: #{_lambda_.1} parent=31 // pred_fallthru
          _
        // Predicated region
        $region66: #{_lambda_.1} parent=31 // pred_check
          _
        $region67: #{_lambda_.1} parent=31 // pred_check_branch
          %296 = sbr.rel (0) target = $region69
        $region68: #{_lambda_.1} parent=31 // pred_region
          %297 = vsyncadd [#allocation3], 2880
        $region69: #{_lambda_.1} parent=31 // pred_fallthru
          _
      $region32: #{_lambda_.1} parent=27 // pred_fallthru
        _
      %s298 = smul.u32 %s161, 240
      %s299 = scalar_lea.vmem [#allocation2], %s298
      %s300 = scalar_lea.sflag [#allocation3], %s161
      %s301 = smul.u32 10, 18
      %s302 = smul.u32 %s301, 1
      %s303 = sshll.u32 %s302, 4
      %304 = dma.done %s300, %s303
      %s305 = sadd.s32 %s19, 1
      %p306 = scmp.lt.s32.totalorder %s305, 2
      // Predicated region
      $region70: #{_lambda_.1} parent=27 // pred_check
        %p307 = pneg %p306
      $region71: #{_lambda_.1} parent=27 // pred_check_branch
        %309 = sbr.rel (%p307) target = $region73
      $region72: #{_lambda_.1} parent=27 // pred_region
        %s310 = ssub.s32 1, %s161
        %s311 = smul.u32 %s305, 8
        %s312 = smul.u32 %s311, 24
        %s313 = smul.u32 %s18, 432
        %s314 = sadd.s32 %s312, %s313
        %s315 = scalar_lea.vmem %s0, %s314
        %s316 = smul.u32 %s310, 240
        %s317 = scalar_lea.vmem [#allocation2], %s316
        %s318 = scalar_lea.sflag [#allocation3], %s310
        %p320 = scmp.lt.u32.totalorder 18, 8
        %p321 = pneg %p320
        // Predicated region
        $region74: #{_lambda_.1} parent=72 // pred_check
          _
        $region75: #{_lambda_.1} parent=72 // pred_check_branch
          %323 = sbr.rel (%p320) target = $region77
        $region76: #{_lambda_.1} parent=72 // pred_region
          %s357 = sand.u32 18, 7
          %p358 = scmp.eq.s32.totalorder %s357, 0
          %p359 = pneg %p358
          // Predicated region
          $region89: #{_lambda_.1} parent=76 // pred_check
            _
          $region90: #{_lambda_.1} parent=76 // pred_check_branch
            %361 = sbr.rel (%p358) target = $region92
          $region91: #{_lambda_.1} parent=76 // pred_region
            %s362 = sand.u32 18, 7
            %s363 = ssub.s32 18, %s362
            %s364 = scalar_lea.vmem %s315, %s363
            %s365 = ssub.s32 18, %s362
            %s366 = scalar_lea.vmem %s317, %s365 [#allocation2]
            loop: start=0, step=1, limit=1
            $region93: #{_lambda_.1} parent=91 // loop_pre_header
              _
            $region94: #{_lambda_.1} parent=91 // loop_header
              %s368 = sphi 0, %s372
              %p369 = scmp.ge.s32.totalorder %s368, 1
              %s373 = sphi %s315, %s315
              %s374 = sphi %s317, %s317
            $region95: #{_lambda_.1} parent=91 // loop_header_branch
              %371 = sbr.rel (%p369) target = $region99
            $region96: #{_lambda_.1} parent=91 // loop_body
              %v375 = vld [vmem:[%s373] sm:$0xff]
              %376 = vst [vmem:[%s374] sm:$0xff] %v375
              %v377 = vld [vmem:[%s373 + $0x8] sm:$0xff]
              %378 = vst [vmem:[%s374 + $0x8] sm:$0xff] %v377
              %v379 = vld [vmem:[%s373 + $0x18] sm:$0xff]
              %380 = vst [vmem:[%s374 + $0x18] sm:$0xff] %v379
              %v381 = vld [vmem:[%s373 + $0x20] sm:$0xff]
              %382 = vst [vmem:[%s374 + $0x20] sm:$0xff] %v381
              %v383 = vld [vmem:[%s373 + $0x30] sm:$0xff]
              %384 = vst [vmem:[%s374 + $0x30] sm:$0xff] %v383
              %v385 = vld [vmem:[%s373 + $0x38] sm:$0xff]
              %386 = vst [vmem:[%s374 + $0x38] sm:$0xff] %v385
              %v387 = vld [vmem:[%s373 + $0x48] sm:$0xff]
              %388 = vst [vmem:[%s374 + $0x48] sm:$0xff] %v387
              %v389 = vld [vmem:[%s373 + $0x50] sm:$0xff]
              %390 = vst [vmem:[%s374 + $0x50] sm:$0xff] %v389
              %v391 = vld [vmem:[%s373 + $0x60] sm:$0xff]
              %392 = vst [vmem:[%s374 + $0x60] sm:$0xff] %v391
              %v393 = vld [vmem:[%s373 + $0x68] sm:$0xff]
              %394 = vst [vmem:[%s374 + $0x68] sm:$0xff] %v393
              %v395 = vld [vmem:[%s373 + $0x78] sm:$0xff]
              %396 = vst [vmem:[%s374 + $0x78] sm:$0xff] %v395
              %v397 = vld [vmem:[%s373 + $0x80] sm:$0xff]
              %398 = vst [vmem:[%s374 + $0x80] sm:$0xff] %v397
              %v399 = vld [vmem:[%s373 + $0x90] sm:$0xff]
              %400 = vst [vmem:[%s374 + $0x90] sm:$0xff] %v399
              %v401 = vld [vmem:[%s373 + $0x98] sm:$0xff]
              %402 = vst [vmem:[%s374 + $0x98] sm:$0xff] %v401
              %v403 = vld [vmem:[%s373 + $0xa8] sm:$0xff]
              %404 = vst [vmem:[%s374 + $0xa8] sm:$0xff] %v403
              %v405 = vld [vmem:[%s373 + $0xb0] sm:$0xff]
              %406 = vst [vmem:[%s374 + $0xb0] sm:$0xff] %v405
              %v407 = vld [vmem:[%s373 + $0xc0] sm:$0xff]
              %408 = vst [vmem:[%s374 + $0xc0] sm:$0xff] %v407
              %v409 = vld [vmem:[%s373 + $0xc8] sm:$0xff]
              %410 = vst [vmem:[%s374 + $0xc8] sm:$0xff] %v409
              %v411 = vld [vmem:[%s373 + $0xd8] sm:$0xff]
              %412 = vst [vmem:[%s374 + $0xd8] sm:$0xff] %v411
              %v413 = vld [vmem:[%s373 + $0xe0] sm:$0xff]
              %414 = vst [vmem:[%s374 + $0xe0] sm:$0xff] %v413
            $region97: #{_lambda_.1} parent=91 // loop_footer
              %s372 = sadd.s32 1, %s368
            $region98: #{_lambda_.1} parent=91 // loop_footer_branch
              %367 = sbr.rel target = $region94
            $region99: #{_lambda_.1} parent=91 // loop_exit
              _
            %s415 = sshll.u32 1, %s362
            %s416 = ssub.s32 %s415, 1
            loop: start=0, step=1, limit=1
            $region100: #{_lambda_.1} parent=91 // loop_pre_header
              _
            $region101: #{_lambda_.1} parent=91 // loop_header
              %s418 = sphi 0, %s422
              %p419 = scmp.ge.s32.totalorder %s418, 1
              %s423 = sphi %s364, %s364
              %s424 = sphi %s366, %s366
            $region102: #{_lambda_.1} parent=91 // loop_header_branch
              %421 = sbr.rel (%p419) target = $region106
            $region103: #{_lambda_.1} parent=91 // loop_body
              %v425 = vld [vmem:[%s423] sm:%s416]
              %426 = vst [vmem:[%s424] sm:%s416] %v425
              %v427 = vld [vmem:[%s423 + $0x18] sm:%s416]
              %428 = vst [vmem:[%s424 + $0x18] sm:%s416] %v427
              %v429 = vld [vmem:[%s423 + $0x30] sm:%s416]
              %430 = vst [vmem:[%s424 + $0x30] sm:%s416] %v429
              %v431 = vld [vmem:[%s423 + $0x48] sm:%s416]
              %432 = vst [vmem:[%s424 + $0x48] sm:%s416] %v431
              %v433 = vld [vmem:[%s423 + $0x60] sm:%s416]
              %434 = vst [vmem:[%s424 + $0x60] sm:%s416] %v433
              %v435 = vld [vmem:[%s423 + $0x78] sm:%s416]
              %436 = vst [vmem:[%s424 + $0x78] sm:%s416] %v435
              %v437 = vld [vmem:[%s423 + $0x90] sm:%s416]
              %438 = vst [vmem:[%s424 + $0x90] sm:%s416] %v437
              %v439 = vld [vmem:[%s423 + $0xa8] sm:%s416]
              %440 = vst [vmem:[%s424 + $0xa8] sm:%s416] %v439
              %v441 = vld [vmem:[%s423 + $0xc0] sm:%s416]
              %442 = vst [vmem:[%s424 + $0xc0] sm:%s416] %v441
              %v443 = vld [vmem:[%s423 + $0xd8] sm:%s416]
              %444 = vst [vmem:[%s424 + $0xd8] sm:%s416] %v443
            $region104: #{_lambda_.1} parent=91 // loop_footer
              %s422 = sadd.s32 1, %s418
            $region105: #{_lambda_.1} parent=91 // loop_footer_branch
              %417 = sbr.rel target = $region101
            $region106: #{_lambda_.1} parent=91 // loop_exit
              _
          $region92: #{_lambda_.1} parent=76 // pred_fallthru
            _
        $region77: #{_lambda_.1} parent=72 // pred_fallthru
          _
        // Predicated region
        $region78: #{_lambda_.1} parent=72 // pred_check
          %p324 = pneg %p320
        $region79: #{_lambda_.1} parent=72 // pred_check_branch
          %326 = sbr.rel (%p324) target = $region81
        $region80: #{_lambda_.1} parent=72 // pred_region
          %s327 = sshll.u32 1, 18
          %s328 = ssub.s32 %s327, 1
          loop: start=0, step=1, limit=1
          $region82: #{_lambda_.1} parent=80 // loop_pre_header
            _
          $region83: #{_lambda_.1} parent=80 // loop_header
            %s330 = sphi 0, %s334
            %p331 = scmp.ge.s32.totalorder %s330, 1
            %s335 = sphi %s315, %s315
            %s336 = sphi %s317, %s317
          $region84: #{_lambda_.1} parent=80 // loop_header_branch
            %333 = sbr.rel (%p331) target = $region88
          $region85: #{_lambda_.1} parent=80 // loop_body
            %v337 = vld [vmem:[%s335] sm:%s328]
            %338 = vst [vmem:[%s336] sm:%s328] %v337
            %v339 = vld [vmem:[%s335 + $0x18] sm:%s328]
            %340 = vst [vmem:[%s336 + $0x18] sm:%s328] %v339
            %v341 = vld [vmem:[%s335 + $0x30] sm:%s328]
            %342 = vst [vmem:[%s336 + $0x30] sm:%s328] %v341
            %v343 = vld [vmem:[%s335 + $0x48] sm:%s328]
            %344 = vst [vmem:[%s336 + $0x48] sm:%s328] %v343
            %v345 = vld [vmem:[%s335 + $0x60] sm:%s328]
            %346 = vst [vmem:[%s336 + $0x60] sm:%s328] %v345
            %v347 = vld [vmem:[%s335 + $0x78] sm:%s328]
            %348 = vst [vmem:[%s336 + $0x78] sm:%s328] %v347
            %v349 = vld [vmem:[%s335 + $0x90] sm:%s328]
            %350 = vst [vmem:[%s336 + $0x90] sm:%s328] %v349
            %v351 = vld [vmem:[%s335 + $0xa8] sm:%s328]
            %352 = vst [vmem:[%s336 + $0xa8] sm:%s328] %v351
            %v353 = vld [vmem:[%s335 + $0xc0] sm:%s328]
            %354 = vst [vmem:[%s336 + $0xc0] sm:%s328] %v353
            %v355 = vld [vmem:[%s335 + $0xd8] sm:%s328]
            %356 = vst [vmem:[%s336 + $0xd8] sm:%s328] %v355
          $region86: #{_lambda_.1} parent=80 // loop_footer
            %s334 = sadd.s32 1, %s330
          $region87: #{_lambda_.1} parent=80 // loop_footer_branch
            %329 = sbr.rel target = $region83
          $region88: #{_lambda_.1} parent=80 // loop_exit
            _
        $region81: #{_lambda_.1} parent=72 // pred_fallthru
          _
        // Predicated region
        $region107: #{_lambda_.1} parent=72 // pred_check
          _
        $region108: #{_lambda_.1} parent=72 // pred_check_branch
          %447 = sbr.rel (0) target = $region110
        $region109: #{_lambda_.1} parent=72 // pred_region
          %448 = vsyncadd %s318, 2880
        $region110: #{_lambda_.1} parent=72 // pred_fallthru
          _
      $region73: #{_lambda_.1} parent=27 // pred_fallthru
        _
      %v449 = vld [vmem:[%s299] sm:$0xff]
      %v450 = vld [vmem:[%s299 + $0x8] sm:$0xff]
      %v451 = vld [vmem:[%s299 + $0x10] sm:$0x3]
      %v452 = vld [vmem:[%s299 + $0x18] sm:$0xff]
      %v453 = vld [vmem:[%s299 + $0x20] sm:$0xff]
      %v454 = vld [vmem:[%s299 + $0x28] sm:$0x3]
      %v455 = vld [vmem:[%s299 + $0x30] sm:$0xff]
      %v456 = vld [vmem:[%s299 + $0x38] sm:$0xff]
      %v457 = vld [vmem:[%s299 + $0x40] sm:$0x3]
      %v458 = vld [vmem:[%s299 + $0x48] sm:$0xff]
      %v459 = vld [vmem:[%s299 + $0x50] sm:$0xff]
      %v460 = vld [vmem:[%s299 + $0x58] sm:$0x3]
      %v461 = vld [vmem:[%s299 + $0x60] sm:$0xff]
      %v462 = vld [vmem:[%s299 + $0x68] sm:$0xff]
      %v463 = vld [vmem:[%s299 + $0x70] sm:$0x3]
      %v464 = vld [vmem:[%s299 + $0x78] sm:$0xff]
      %v465 = vld [vmem:[%s299 + $0x80] sm:$0xff]
      %v466 = vld [vmem:[%s299 + $0x88] sm:$0x3]
      %v467 = vld [vmem:[%s299 + $0x90] sm:$0xff]
      %v468 = vld [vmem:[%s299 + $0x98] sm:$0xff]
      %v469 = vld [vmem:[%s299 + $0xa0] sm:$0x3]
      %v470 = vld [vmem:[%s299 + $0xa8] sm:$0xff]
      %v471 = vld [vmem:[%s299 + $0xb0] sm:$0xff]
      %v472 = vld [vmem:[%s299 + $0xb8] sm:$0x3]
      %v473 = vld [vmem:[%s299 + $0xc0] sm:$0xff]
      %v474 = vld [vmem:[%s299 + $0xc8] sm:$0xff]
      %v475 = vld [vmem:[%s299 + $0xd0] sm:$0x3]
      %v476 = vld [vmem:[%s299 + $0xd8] sm:$0xff]
      %v477 = vld [vmem:[%s299 + $0xe0] sm:$0xff]
      %v478 = vld [vmem:[%s299 + $0xe8] sm:$0x3]
      %v479 = vld [vmem:[%s1] sm:$0x7]
      %v480 = vld [vmem:[%s1 + $0x4] sm:$0x7]
      %v481 = vld [vmem:[%s1 + $0x8] sm:$0x7]
      %v482 = vlaneseq
      %v483 = vshrl.u32 %v482, 7
      %v484 = vsub.s32 0, %v483
      %v485 = vrot.slane %v479, %v484
      %v486 = vmul.f32 %v449, %v485
      %v487 = vmul.f32 %v450, %v485
      %v488 = vmul.f32 %v452, %v485
      %v489 = vmul.f32 %v453, %v485
      %v490 = vmul.f32 %v455, %v485
      %v491 = vmul.f32 %v456, %v485
      %v492 = vmul.f32 %v458, %v485
      %v493 = vmul.f32 %v459, %v485
      %v494 = vmul.f32 %v461, %v485
      %v495 = vmul.f32 %v462, %v485
      %v496 = vmul.f32 %v464, %v485
      %v497 = vmul.f32 %v465, %v485
      %v498 = vmul.f32 %v467, %v485
      %v499 = vmul.f32 %v468, %v485
      %v500 = vmul.f32 %v470, %v485
      %v501 = vmul.f32 %v471, %v485
      %v502 = vlaneseq
      %v503 = vshrl.u32 %v502, 7
      %v504 = vsub.s32 1, %v503
      %v505 = vrot.slane %v479, %v504
      %v506 = vmul.f32 %v449, %v505
      %v507 = vmul.f32 %v450, %v505
      %v508 = vmul.f32 %v451, %v505
      %v509 = vmul.f32 %v452, %v505
      %v510 = vmul.f32 %v453, %v505
      %v511 = vmul.f32 %v454, %v505
      %v512 = vmul.f32 %v455, %v505
      %v513 = vmul.f32 %v456, %v505
      %v514 = vmul.f32 %v457, %v505
      %v515 = vmul.f32 %v458, %v505
      %v516 = vmul.f32 %v459, %v505
      %v517 = vmul.f32 %v460, %v505
      %v518 = vmul.f32 %v461, %v505
      %v519 = vmul.f32 %v462, %v505
      %v520 = vmul.f32 %v463, %v505
      %v521 = vmul.f32 %v464, %v505
      %v522 = vmul.f32 %v465, %v505
      %v523 = vmul.f32 %v466, %v505
      %v524 = vmul.f32 %v467, %v505
      %v525 = vmul.f32 %v468, %v505
      %v526 = vmul.f32 %v469, %v505
      %v527 = vmul.f32 %v470, %v505
      %v528 = vmul.f32 %v471, %v505
      %v529 = vmul.f32 %v472, %v505
      %vm554 = vcmask 1046528
      %v555 = vrot.slane %v506, 1
      %v556 = vrot.slane %v507, 1
      %v557 = vsel %vm554, %v555, %v556
      %v558 = vrot.slane %v508, 1
      %v559 = vsel %vm554, %v556, %v558
      %v560 = vrot.slane %v509, 1
      %v561 = vrot.slane %v510, 1
      %v562 = vsel %vm554, %v560, %v561
      %v563 = vrot.slane %v511, 1
      %v564 = vsel %vm554, %v561, %v563
      %v565 = vrot.slane %v512, 1
      %v566 = vrot.slane %v513, 1
      %v567 = vsel %vm554, %v565, %v566
      %v568 = vrot.slane %v514, 1
      %v569 = vsel %vm554, %v566, %v568
      %v570 = vrot.slane %v515, 1
      %v571 = vrot.slane %v516, 1
      %v572 = vsel %vm554, %v570, %v571
      %v573 = vrot.slane %v517, 1
      %v574 = vsel %vm554, %v571, %v573
      %v575 = vrot.slane %v518, 1
      %v576 = vrot.slane %v519, 1
      %v577 = vsel %vm554, %v575, %v576
      %v578 = vrot.slane %v520, 1
      %v579 = vsel %vm554, %v576, %v578
      %v580 = vrot.slane %v521, 1
      %v581 = vrot.slane %v522, 1
      %v582 = vsel %vm554, %v580, %v581
      %v583 = vrot.slane %v523, 1
      %v584 = vsel %vm554, %v581, %v583
      %v585 = vrot.slane %v524, 1
      %v586 = vrot.slane %v525, 1
      %v587 = vsel %vm554, %v585, %v586
      %v588 = vrot.slane %v526, 1
      %v589 = vsel %vm554, %v586, %v588
      %v590 = vrot.slane %v527, 1
      %v591 = vrot.slane %v528, 1
      %v592 = vsel %vm554, %v590, %v591
      %v593 = vrot.slane %v529, 1
      %v594 = vsel %vm554, %v591, %v593
      %v611 = vadd.f32 %v486, %v557
      %v612 = vadd.f32 %v487, %v559
      %v613 = vadd.f32 %v488, %v562
      %v614 = vadd.f32 %v489, %v564
      %v615 = vadd.f32 %v490, %v567
      %v616 = vadd.f32 %v491, %v569
      %v617 = vadd.f32 %v492, %v572
      %v618 = vadd.f32 %v493, %v574
      %v619 = vadd.f32 %v494, %v577
      %v620 = vadd.f32 %v495, %v579
      %v621 = vadd.f32 %v496, %v582
      %v622 = vadd.f32 %v497, %v584
      %v623 = vadd.f32 %v498, %v587
      %v624 = vadd.f32 %v499, %v589
      %v625 = vadd.f32 %v500, %v592
      %v626 = vadd.f32 %v501, %v594
      %v627 = vlaneseq
      %v628 = vshrl.u32 %v627, 7
      %v629 = vsub.s32 2, %v628
      %v630 = vrot.slane %v479, %v629
      %v631 = vmul.f32 %v449, %v630
      %v632 = vmul.f32 %v450, %v630
      %v633 = vmul.f32 %v451, %v630
      %v634 = vmul.f32 %v452, %v630
      %v635 = vmul.f32 %v453, %v630
      %v636 = vmul.f32 %v454, %v630
      %v637 = vmul.f32 %v455, %v630
      %v638 = vmul.f32 %v456, %v630
      %v639 = vmul.f32 %v457, %v630
      %v640 = vmul.f32 %v458, %v630
      %v641 = vmul.f32 %v459, %v630
      %v642 = vmul.f32 %v460, %v630
      %v643 = vmul.f32 %v461, %v630
      %v644 = vmul.f32 %v462, %v630
      %v645 = vmul.f32 %v463, %v630
      %v646 = vmul.f32 %v464, %v630
      %v647 = vmul.f32 %v465, %v630
      %v648 = vmul.f32 %v466, %v630
      %v649 = vmul.f32 %v467, %v630
      %v650 = vmul.f32 %v468, %v630
      %v651 = vmul.f32 %v469, %v630
      %v652 = vmul.f32 %v470, %v630
      %v653 = vmul.f32 %v471, %v630
      %v654 = vmul.f32 %v472, %v630
      %vm679 = vcmask 1045504
      %v680 = vrot.slane %v631, 2
      %v681 = vrot.slane %v632, 2
      %v682 = vsel %vm679, %v680, %v681
      %v683 = vrot.slane %v633, 2
      %v684 = vsel %vm679, %v681, %v683
      %v685 = vrot.slane %v634, 2
      %v686 = vrot.slane %v635, 2
      %v687 = vsel %vm679, %v685, %v686
      %v688 = vrot.slane %v636, 2
      %v689 = vsel %vm679, %v686, %v688
      %v690 = vrot.slane %v637, 2
      %v691 = vrot.slane %v638, 2
      %v692 = vsel %vm679, %v690, %v691
      %v693 = vrot.slane %v639, 2
      %v694 = vsel %vm679, %v691, %v693
      %v695 = vrot.slane %v640, 2
      %v696 = vrot.slane %v641, 2
      %v697 = vsel %vm679, %v695, %v696
      %v698 = vrot.slane %v642, 2
      %v699 = vsel %vm679, %v696, %v698
      %v700 = vrot.slane %v643, 2
      %v701 = vrot.slane %v644, 2
      %v702 = vsel %vm679, %v700, %v701
      %v703 = vrot.slane %v645, 2
      %v704 = vsel %vm679, %v701, %v703
      %v705 = vrot.slane %v646, 2
      %v706 = vrot.slane %v647, 2
      %v707 = vsel %vm679, %v705, %v706
      %v708 = vrot.slane %v648, 2
      %v709 = vsel %vm679, %v706, %v708
      %v710 = vrot.slane %v649, 2
      %v711 = vrot.slane %v650, 2
      %v712 = vsel %vm679, %v710, %v711
      %v713 = vrot.slane %v651, 2
      %v714 = vsel %vm679, %v711, %v713
      %v715 = vrot.slane %v652, 2
      %v716 = vrot.slane %v653, 2
      %v717 = vsel %vm679, %v715, %v716
      %v718 = vrot.slane %v654, 2
      %v719 = vsel %vm679, %v716, %v718
      %v736 = vadd.f32 %v611, %v682
      %v737 = vadd.f32 %v612, %v684
      %v738 = vadd.f32 %v613, %v687
      %v739 = vadd.f32 %v614, %v689
      %v740 = vadd.f32 %v615, %v692
      %v741 = vadd.f32 %v616, %v694
      %v742 = vadd.f32 %v617, %v697
      %v743 = vadd.f32 %v618, %v699
      %v744 = vadd.f32 %v619, %v702
      %v745 = vadd.f32 %v620, %v704
      %v746 = vadd.f32 %v621, %v707
      %v747 = vadd.f32 %v622, %v709
      %v748 = vadd.f32 %v623, %v712
      %v749 = vadd.f32 %v624, %v714
      %v750 = vadd.f32 %v625, %v717
      %v751 = vadd.f32 %v626, %v719
      %752 = vst [vmem:[#allocation4] sm:$0xff] %v736
      %753 = vst [vmem:[#allocation4 + $0x8] sm:$0xff] %v737
      %754 = vst [vmem:[#allocation4 + $0x10] sm:$0xff] %v738
      %755 = vst [vmem:[#allocation4 + $0x18] sm:$0xff] %v739
      %756 = vst [vmem:[#allocation4 + $0x20] sm:$0xff] %v740
      %757 = vst [vmem:[#allocation4 + $0x28] sm:$0xff] %v741
      %758 = vst [vmem:[#allocation4 + $0x30] sm:$0xff] %v742
      %759 = vst [vmem:[#allocation4 + $0x38] sm:$0xff] %v743
      %760 = vst [vmem:[#allocation4 + $0x40] sm:$0xff] %v744
      %761 = vst [vmem:[#allocation4 + $0x48] sm:$0xff] %v745
      %762 = vst [vmem:[#allocation4 + $0x50] sm:$0xff] %v746
      %763 = vst [vmem:[#allocation4 + $0x58] sm:$0xff] %v747
      %764 = vst [vmem:[#allocation4 + $0x60] sm:$0xff] %v748
      %765 = vst [vmem:[#allocation4 + $0x68] sm:$0xff] %v749
      %766 = vst [vmem:[#allocation4 + $0x70] sm:$0xff] %v750
      %767 = vst [vmem:[#allocation4 + $0x78] sm:$0xff] %v751
      %v768 = vlaneseq
      %v769 = vshrl.u32 %v768, 7
      %v770 = vsub.s32 0, %v769
      %v771 = vrot.slane %v480, %v770
      %v772 = vmul.f32 %v452, %v771
      %v773 = vmul.f32 %v453, %v771
      %v774 = vmul.f32 %v455, %v771
      %v775 = vmul.f32 %v456, %v771
      %v776 = vmul.f32 %v458, %v771
      %v777 = vmul.f32 %v459, %v771
      %v778 = vmul.f32 %v461, %v771
      %v779 = vmul.f32 %v462, %v771
      %v780 = vmul.f32 %v464, %v771
      %v781 = vmul.f32 %v465, %v771
      %v782 = vmul.f32 %v467, %v771
      %v783 = vmul.f32 %v468, %v771
      %v784 = vmul.f32 %v470, %v771
      %v785 = vmul.f32 %v471, %v771
      %v786 = vmul.f32 %v473, %v771
      %v787 = vmul.f32 %v474, %v771
      %v788 = vlaneseq
      %v789 = vshrl.u32 %v788, 7
      %v790 = vsub.s32 1, %v789
      %v791 = vrot.slane %v480, %v790
      %v792 = vmul.f32 %v452, %v791
      %v793 = vmul.f32 %v453, %v791
      %v794 = vmul.f32 %v454, %v791
      %v795 = vmul.f32 %v455, %v791
      %v796 = vmul.f32 %v456, %v791
      %v797 = vmul.f32 %v457, %v791
      %v798 = vmul.f32 %v458, %v791
      %v799 = vmul.f32 %v459, %v791
      %v800 = vmul.f32 %v460, %v791
      %v801 = vmul.f32 %v461, %v791
      %v802 = vmul.f32 %v462, %v791
      %v803 = vmul.f32 %v463, %v791
      %v804 = vmul.f32 %v464, %v791
      %v805 = vmul.f32 %v465, %v791
      %v806 = vmul.f32 %v466, %v791
      %v807 = vmul.f32 %v467, %v791
      %v808 = vmul.f32 %v468, %v791
      %v809 = vmul.f32 %v469, %v791
      %v810 = vmul.f32 %v470, %v791
      %v811 = vmul.f32 %v471, %v791
      %v812 = vmul.f32 %v472, %v791
      %v813 = vmul.f32 %v473, %v791
      %v814 = vmul.f32 %v474, %v791
      %v815 = vmul.f32 %v475, %v791
      %v840 = vrot.slane %v792, 1
      %v841 = vrot.slane %v793, 1
      %v842 = vsel %vm554, %v840, %v841
      %v843 = vrot.slane %v794, 1
      %v844 = vsel %vm554, %v841, %v843
      %v845 = vrot.slane %v795, 1
      %v846 = vrot.slane %v796, 1
      %v847 = vsel %vm554, %v845, %v846
      %v848 = vrot.slane %v797, 1
      %v849 = vsel %vm554, %v846, %v848
      %v850 = vrot.slane %v798, 1
      %v851 = vrot.slane %v799, 1
      %v852 = vsel %vm554, %v850, %v851
      %v853 = vrot.slane %v800, 1
      %v854 = vsel %vm554, %v851, %v853
      %v855 = vrot.slane %v801, 1
      %v856 = vrot.slane %v802, 1
      %v857 = vsel %vm554, %v855, %v856
      %v858 = vrot.slane %v803, 1
      %v859 = vsel %vm554, %v856, %v858
      %v860 = vrot.slane %v804, 1
      %v861 = vrot.slane %v805, 1
      %v862 = vsel %vm554, %v860, %v861
      %v863 = vrot.slane %v806, 1
      %v864 = vsel %vm554, %v861, %v863
      %v865 = vrot.slane %v807, 1
      %v866 = vrot.slane %v808, 1
      %v867 = vsel %vm554, %v865, %v866
      %v868 = vrot.slane %v809, 1
      %v869 = vsel %vm554, %v866, %v868
      %v870 = vrot.slane %v810, 1
      %v871 = vrot.slane %v811, 1
      %v872 = vsel %vm554, %v870, %v871
      %v873 = vrot.slane %v812, 1
      %v874 = vsel %vm554, %v871, %v873
      %v875 = vrot.slane %v813, 1
      %v876 = vrot.slane %v814, 1
      %v877 = vsel %vm554, %v875, %v876
      %v878 = vrot.slane %v815, 1
      %v879 = vsel %vm554, %v876, %v878
      %v896 = vadd.f32 %v772, %v842
      %v897 = vadd.f32 %v773, %v844
      %v898 = vadd.f32 %v774, %v847
      %v899 = vadd.f32 %v775, %v849
      %v900 = vadd.f32 %v776, %v852
      %v901 = vadd.f32 %v777, %v854
      %v902 = vadd.f32 %v778, %v857
      %v903 = vadd.f32 %v779, %v859
      %v904 = vadd.f32 %v780, %v862
      %v905 = vadd.f32 %v781, %v864
      %v906 = vadd.f32 %v782, %v867
      %v907 = vadd.f32 %v783, %v869
      %v908 = vadd.f32 %v784, %v872
      %v909 = vadd.f32 %v785, %v874
      %v910 = vadd.f32 %v786, %v877
      %v911 = vadd.f32 %v787, %v879
      %v912 = vlaneseq
      %v913 = vshrl.u32 %v912, 7
      %v914 = vsub.s32 2, %v913
      %v915 = vrot.slane %v480, %v914
      %v916 = vmul.f32 %v452, %v915
      %v917 = vmul.f32 %v453, %v915
      %v918 = vmul.f32 %v454, %v915
      %v919 = vmul.f32 %v455, %v915
      %v920 = vmul.f32 %v456, %v915
      %v921 = vmul.f32 %v457, %v915
      %v922 = vmul.f32 %v458, %v915
      %v923 = vmul.f32 %v459, %v915
      %v924 = vmul.f32 %v460, %v915
      %v925 = vmul.f32 %v461, %v915
      %v926 = vmul.f32 %v462, %v915
      %v927 = vmul.f32 %v463, %v915
      %v928 = vmul.f32 %v464, %v915
      %v929 = vmul.f32 %v465, %v915
      %v930 = vmul.f32 %v466, %v915
      %v931 = vmul.f32 %v467, %v915
      %v932 = vmul.f32 %v468, %v915
      %v933 = vmul.f32 %v469, %v915
      %v934 = vmul.f32 %v470, %v915
      %v935 = vmul.f32 %v471, %v915
      %v936 = vmul.f32 %v472, %v915
      %v937 = vmul.f32 %v473, %v915
      %v938 = vmul.f32 %v474, %v915
      %v939 = vmul.f32 %v475, %v915
      %v964 = vrot.slane %v916, 2
      %v965 = vrot.slane %v917, 2
      %v966 = vsel %vm679, %v964, %v965
      %v967 = vrot.slane %v918, 2
      %v968 = vsel %vm679, %v965, %v967
      %v969 = vrot.slane %v919, 2
      %v970 = vrot.slane %v920, 2
      %v971 = vsel %vm679, %v969, %v970
      %v972 = vrot.slane %v921, 2
      %v973 = vsel %vm679, %v970, %v972
      %v974 = vrot.slane %v922, 2
      %v975 = vrot.slane %v923, 2
      %v976 = vsel %vm679, %v974, %v975
      %v977 = vrot.slane %v924, 2
      %v978 = vsel %vm679, %v975, %v977
      %v979 = vrot.slane %v925, 2
      %v980 = vrot.slane %v926, 2
      %v981 = vsel %vm679, %v979, %v980
      %v982 = vrot.slane %v927, 2
      %v983 = vsel %vm679, %v980, %v982
      %v984 = vrot.slane %v928, 2
      %v985 = vrot.slane %v929, 2
      %v986 = vsel %vm679, %v984, %v985
      %v987 = vrot.slane %v930, 2
      %v988 = vsel %vm679, %v985, %v987
      %v989 = vrot.slane %v931, 2
      %v990 = vrot.slane %v932, 2
      %v991 = vsel %vm679, %v989, %v990
      %v992 = vrot.slane %v933, 2
      %v993 = vsel %vm679, %v990, %v992
      %v994 = vrot.slane %v934, 2
      %v995 = vrot.slane %v935, 2
      %v996 = vsel %vm679, %v994, %v995
      %v997 = vrot.slane %v936, 2
      %v998 = vsel %vm679, %v995, %v997
      %v999 = vrot.slane %v937, 2
      %v1000 = vrot.slane %v938, 2
      %v1001 = vsel %vm679, %v999, %v1000
      %v1002 = vrot.slane %v939, 2
      %v1003 = vsel %vm679, %v1000, %v1002
      %v1020 = vadd.f32 %v896, %v966
      %v1021 = vadd.f32 %v897, %v968
      %v1022 = vadd.f32 %v898, %v971
      %v1023 = vadd.f32 %v899, %v973
      %v1024 = vadd.f32 %v900, %v976
      %v1025 = vadd.f32 %v901, %v978
      %v1026 = vadd.f32 %v902, %v981
      %v1027 = vadd.f32 %v903, %v983
      %v1028 = vadd.f32 %v904, %v986
      %v1029 = vadd.f32 %v905, %v988
      %v1030 = vadd.f32 %v906, %v991
      %v1031 = vadd.f32 %v907, %v993
      %v1032 = vadd.f32 %v908, %v996
      %v1033 = vadd.f32 %v909, %v998
      %v1034 = vadd.f32 %v910, %v1001
      %v1035 = vadd.f32 %v911, %v1003
      %v1036 = vld [vmem:[#allocation4] sm:$0xff]
      %v1037 = vld [vmem:[#allocation4 + $0x8] sm:$0xff]
      %v1038 = vld [vmem:[#allocation4 + $0x10] sm:$0xff]
      %v1039 = vld [vmem:[#allocation4 + $0x18] sm:$0xff]
      %v1040 = vld [vmem:[#allocation4 + $0x20] sm:$0xff]
      %v1041 = vld [vmem:[#allocation4 + $0x28] sm:$0xff]
      %v1042 = vld [vmem:[#allocation4 + $0x30] sm:$0xff]
      %v1043 = vld [vmem:[#allocation4 + $0x38] sm:$0xff]
      %v1044 = vld [vmem:[#allocation4 + $0x40] sm:$0xff]
      %v1045 = vld [vmem:[#allocation4 + $0x48] sm:$0xff]
      %v1046 = vld [vmem:[#allocation4 + $0x50] sm:$0xff]
      %v1047 = vld [vmem:[#allocation4 + $0x58] sm:$0xff]
      %v1048 = vld [vmem:[#allocation4 + $0x60] sm:$0xff]
      %v1049 = vld [vmem:[#allocation4 + $0x68] sm:$0xff]
      %v1050 = vld [vmem:[#allocation4 + $0x70] sm:$0xff]
      %v1051 = vld [vmem:[#allocation4 + $0x78] sm:$0xff]
      %v1052 = vadd.f32 %v1036, %v1020
      %v1053 = vadd.f32 %v1037, %v1021
      %v1054 = vadd.f32 %v1038, %v1022
      %v1055 = vadd.f32 %v1039, %v1023
      %v1056 = vadd.f32 %v1040, %v1024
      %v1057 = vadd.f32 %v1041, %v1025
      %v1058 = vadd.f32 %v1042, %v1026
      %v1059 = vadd.f32 %v1043, %v1027
      %v1060 = vadd.f32 %v1044, %v1028
      %v1061 = vadd.f32 %v1045, %v1029
      %v1062 = vadd.f32 %v1046, %v1030
      %v1063 = vadd.f32 %v1047, %v1031
      %v1064 = vadd.f32 %v1048, %v1032
      %v1065 = vadd.f32 %v1049, %v1033
      %v1066 = vadd.f32 %v1050, %v1034
      %v1067 = vadd.f32 %v1051, %v1035
      %1068 = vst [vmem:[#allocation4] sm:$0xff] %v1052
      %1069 = vst [vmem:[#allocation4 + $0x8] sm:$0xff] %v1053
      %1070 = vst [vmem:[#allocation4 + $0x10] sm:$0xff] %v1054
      %1071 = vst [vmem:[#allocation4 + $0x18] sm:$0xff] %v1055
      %1072 = vst [vmem:[#allocation4 + $0x20] sm:$0xff] %v1056
      %1073 = vst [vmem:[#allocation4 + $0x28] sm:$0xff] %v1057
      %1074 = vst [vmem:[#allocation4 + $0x30] sm:$0xff] %v1058
      %1075 = vst [vmem:[#allocation4 + $0x38] sm:$0xff] %v1059
      %1076 = vst [vmem:[#allocation4 + $0x40] sm:$0xff] %v1060
      %1077 = vst [vmem:[#allocation4 + $0x48] sm:$0xff] %v1061
      %1078 = vst [vmem:[#allocation4 + $0x50] sm:$0xff] %v1062
      %1079 = vst [vmem:[#allocation4 + $0x58] sm:$0xff] %v1063
      %1080 = vst [vmem:[#allocation4 + $0x60] sm:$0xff] %v1064
      %1081 = vst [vmem:[#allocation4 + $0x68] sm:$0xff] %v1065
      %1082 = vst [vmem:[#allocation4 + $0x70] sm:$0xff] %v1066
      %1083 = vst [vmem:[#allocation4 + $0x78] sm:$0xff] %v1067
      %v1084 = vlaneseq
      %v1085 = vshrl.u32 %v1084, 7
      %v1086 = vsub.s32 0, %v1085
      %v1087 = vrot.slane %v481, %v1086
      %v1088 = vmul.f32 %v455, %v1087
      %v1089 = vmul.f32 %v456, %v1087
      %v1090 = vmul.f32 %v458, %v1087
      %v1091 = vmul.f32 %v459, %v1087
      %v1092 = vmul.f32 %v461, %v1087
      %v1093 = vmul.f32 %v462, %v1087
      %v1094 = vmul.f32 %v464, %v1087
      %v1095 = vmul.f32 %v465, %v1087
      %v1096 = vmul.f32 %v467, %v1087
      %v1097 = vmul.f32 %v468, %v1087
      %v1098 = vmul.f32 %v470, %v1087
      %v1099 = vmul.f32 %v471, %v1087
      %v1100 = vmul.f32 %v473, %v1087
      %v1101 = vmul.f32 %v474, %v1087
      %v1102 = vmul.f32 %v476, %v1087
      %v1103 = vmul.f32 %v477, %v1087
      %v1104 = vlaneseq
      %v1105 = vshrl.u32 %v1104, 7
      %v1106 = vsub.s32 1, %v1105
      %v1107 = vrot.slane %v481, %v1106
      %v1108 = vmul.f32 %v455, %v1107
      %v1109 = vmul.f32 %v456, %v1107
      %v1110 = vmul.f32 %v457, %v1107
      %v1111 = vmul.f32 %v458, %v1107
      %v1112 = vmul.f32 %v459, %v1107
      %v1113 = vmul.f32 %v460, %v1107
      %v1114 = vmul.f32 %v461, %v1107
      %v1115 = vmul.f32 %v462, %v1107
      %v1116 = vmul.f32 %v463, %v1107
      %v1117 = vmul.f32 %v464, %v1107
      %v1118 = vmul.f32 %v465, %v1107
      %v1119 = vmul.f32 %v466, %v1107
      %v1120 = vmul.f32 %v467, %v1107
      %v1121 = vmul.f32 %v468, %v1107
      %v1122 = vmul.f32 %v469, %v1107
      %v1123 = vmul.f32 %v470, %v1107
      %v1124 = vmul.f32 %v471, %v1107
      %v1125 = vmul.f32 %v472, %v1107
      %v1126 = vmul.f32 %v473, %v1107
      %v1127 = vmul.f32 %v474, %v1107
      %v1128 = vmul.f32 %v475, %v1107
      %v1129 = vmul.f32 %v476, %v1107
      %v1130 = vmul.f32 %v477, %v1107
      %v1131 = vmul.f32 %v478, %v1107
      %v1156 = vrot.slane %v1108, 1
      %v1157 = vrot.slane %v1109, 1
      %v1158 = vsel %vm554, %v1156, %v1157
      %v1159 = vrot.slane %v1110, 1
      %v1160 = vsel %vm554, %v1157, %v1159
      %v1161 = vrot.slane %v1111, 1
      %v1162 = vrot.slane %v1112, 1
      %v1163 = vsel %vm554, %v1161, %v1162
      %v1164 = vrot.slane %v1113, 1
      %v1165 = vsel %vm554, %v1162, %v1164
      %v1166 = vrot.slane %v1114, 1
      %v1167 = vrot.slane %v1115, 1
      %v1168 = vsel %vm554, %v1166, %v1167
      %v1169 = vrot.slane %v1116, 1
      %v1170 = vsel %vm554, %v1167, %v1169
      %v1171 = vrot.slane %v1117, 1
      %v1172 = vrot.slane %v1118, 1
      %v1173 = vsel %vm554, %v1171, %v1172
      %v1174 = vrot.slane %v1119, 1
      %v1175 = vsel %vm554, %v1172, %v1174
      %v1176 = vrot.slane %v1120, 1
      %v1177 = vrot.slane %v1121, 1
      %v1178 = vsel %vm554, %v1176, %v1177
      %v1179 = vrot.slane %v1122, 1
      %v1180 = vsel %vm554, %v1177, %v1179
      %v1181 = vrot.slane %v1123, 1
      %v1182 = vrot.slane %v1124, 1
      %v1183 = vsel %vm554, %v1181, %v1182
      %v1184 = vrot.slane %v1125, 1
      %v1185 = vsel %vm554, %v1182, %v1184
      %v1186 = vrot.slane %v1126, 1
      %v1187 = vrot.slane %v1127, 1
      %v1188 = vsel %vm554, %v1186, %v1187
      %v1189 = vrot.slane %v1128, 1
      %v1190 = vsel %vm554, %v1187, %v1189
      %v1191 = vrot.slane %v1129, 1
      %v1192 = vrot.slane %v1130, 1
      %v1193 = vsel %vm554, %v1191, %v1192
      %v1194 = vrot.slane %v1131, 1
      %v1195 = vsel %vm554, %v1192, %v1194
      %v1212 = vadd.f32 %v1088, %v1158
      %v1213 = vadd.f32 %v1089, %v1160
      %v1214 = vadd.f32 %v1090, %v1163
      %v1215 = vadd.f32 %v1091, %v1165
      %v1216 = vadd.f32 %v1092, %v1168
      %v1217 = vadd.f32 %v1093, %v1170
      %v1218 = vadd.f32 %v1094, %v1173
      %v1219 = vadd.f32 %v1095, %v1175
      %v1220 = vadd.f32 %v1096, %v1178
      %v1221 = vadd.f32 %v1097, %v1180
      %v1222 = vadd.f32 %v1098, %v1183
      %v1223 = vadd.f32 %v1099, %v1185
      %v1224 = vadd.f32 %v1100, %v1188
      %v1225 = vadd.f32 %v1101, %v1190
      %v1226 = vadd.f32 %v1102, %v1193
      %v1227 = vadd.f32 %v1103, %v1195
      %v1228 = vlaneseq
      %v1229 = vshrl.u32 %v1228, 7
      %v1230 = vsub.s32 2, %v1229
      %v1231 = vrot.slane %v481, %v1230
      %v1232 = vmul.f32 %v455, %v1231
      %v1233 = vmul.f32 %v456, %v1231
      %v1234 = vmul.f32 %v457, %v1231
      %v1235 = vmul.f32 %v458, %v1231
      %v1236 = vmul.f32 %v459, %v1231
      %v1237 = vmul.f32 %v460, %v1231
      %v1238 = vmul.f32 %v461, %v1231
      %v1239 = vmul.f32 %v462, %v1231
      %v1240 = vmul.f32 %v463, %v1231
      %v1241 = vmul.f32 %v464, %v1231
      %v1242 = vmul.f32 %v465, %v1231
      %v1243 = vmul.f32 %v466, %v1231
      %v1244 = vmul.f32 %v467, %v1231
      %v1245 = vmul.f32 %v468, %v1231
      %v1246 = vmul.f32 %v469, %v1231
      %v1247 = vmul.f32 %v470, %v1231
      %v1248 = vmul.f32 %v471, %v1231
      %v1249 = vmul.f32 %v472, %v1231
      %v1250 = vmul.f32 %v473, %v1231
      %v1251 = vmul.f32 %v474, %v1231
      %v1252 = vmul.f32 %v475, %v1231
      %v1253 = vmul.f32 %v476, %v1231
      %v1254 = vmul.f32 %v477, %v1231
      %v1255 = vmul.f32 %v478, %v1231
      %v1280 = vrot.slane %v1232, 2
      %v1281 = vrot.slane %v1233, 2
      %v1282 = vsel %vm679, %v1280, %v1281
      %v1283 = vrot.slane %v1234, 2
      %v1284 = vsel %vm679, %v1281, %v1283
      %v1285 = vrot.slane %v1235, 2
      %v1286 = vrot.slane %v1236, 2
      %v1287 = vsel %vm679, %v1285, %v1286
      %v1288 = vrot.slane %v1237, 2
      %v1289 = vsel %vm679, %v1286, %v1288
      %v1290 = vrot.slane %v1238, 2
      %v1291 = vrot.slane %v1239, 2
      %v1292 = vsel %vm679, %v1290, %v1291
      %v1293 = vrot.slane %v1240, 2
      %v1294 = vsel %vm679, %v1291, %v1293
      %v1295 = vrot.slane %v1241, 2
      %v1296 = vrot.slane %v1242, 2
      %v1297 = vsel %vm679, %v1295, %v1296
      %v1298 = vrot.slane %v1243, 2
      %v1299 = vsel %vm679, %v1296, %v1298
      %v1300 = vrot.slane %v1244, 2
      %v1301 = vrot.slane %v1245, 2
      %v1302 = vsel %vm679, %v1300, %v1301
      %v1303 = vrot.slane %v1246, 2
      %v1304 = vsel %vm679, %v1301, %v1303
      %v1305 = vrot.slane %v1247, 2
      %v1306 = vrot.slane %v1248, 2
      %v1307 = vsel %vm679, %v1305, %v1306
      %v1308 = vrot.slane %v1249, 2
      %v1309 = vsel %vm679, %v1306, %v1308
      %v1310 = vrot.slane %v1250, 2
      %v1311 = vrot.slane %v1251, 2
      %v1312 = vsel %vm679, %v1310, %v1311
      %v1313 = vrot.slane %v1252, 2
      %v1314 = vsel %vm679, %v1311, %v1313
      %v1315 = vrot.slane %v1253, 2
      %v1316 = vrot.slane %v1254, 2
      %v1317 = vsel %vm679, %v1315, %v1316
      %v1318 = vrot.slane %v1255, 2
      %v1319 = vsel %vm679, %v1316, %v1318
      %v1336 = vadd.f32 %v1212, %v1282
      %v1337 = vadd.f32 %v1213, %v1284
      %v1338 = vadd.f32 %v1214, %v1287
      %v1339 = vadd.f32 %v1215, %v1289
      %v1340 = vadd.f32 %v1216, %v1292
      %v1341 = vadd.f32 %v1217, %v1294
      %v1342 = vadd.f32 %v1218, %v1297
      %v1343 = vadd.f32 %v1219, %v1299
      %v1344 = vadd.f32 %v1220, %v1302
      %v1345 = vadd.f32 %v1221, %v1304
      %v1346 = vadd.f32 %v1222, %v1307
      %v1347 = vadd.f32 %v1223, %v1309
      %v1348 = vadd.f32 %v1224, %v1312
      %v1349 = vadd.f32 %v1225, %v1314
      %v1350 = vadd.f32 %v1226, %v1317
      %v1351 = vadd.f32 %v1227, %v1319
      %v1352 = vld [vmem:[#allocation4] sm:$0xff]
      %v1353 = vld [vmem:[#allocation4 + $0x8] sm:$0xff]
      %v1354 = vld [vmem:[#allocation4 + $0x10] sm:$0xff]
      %v1355 = vld [vmem:[#allocation4 + $0x18] sm:$0xff]
      %v1356 = vld [vmem:[#allocation4 + $0x20] sm:$0xff]
      %v1357 = vld [vmem:[#allocation4 + $0x28] sm:$0xff]
      %v1358 = vld [vmem:[#allocation4 + $0x30] sm:$0xff]
      %v1359 = vld [vmem:[#allocation4 + $0x38] sm:$0xff]
      %v1360 = vld [vmem:[#allocation4 + $0x40] sm:$0xff]
      %v1361 = vld [vmem:[#allocation4 + $0x48] sm:$0xff]
      %v1362 = vld [vmem:[#allocation4 + $0x50] sm:$0xff]
      %v1363 = vld [vmem:[#allocation4 + $0x58] sm:$0xff]
      %v1364 = vld [vmem:[#allocation4 + $0x60] sm:$0xff]
      %v1365 = vld [vmem:[#allocation4 + $0x68] sm:$0xff]
      %v1366 = vld [vmem:[#allocation4 + $0x70] sm:$0xff]
      %v1367 = vld [vmem:[#allocation4 + $0x78] sm:$0xff]
      %v1368 = vadd.f32 %v1352, %v1336
      %v1369 = vadd.f32 %v1353, %v1337
      %v1370 = vadd.f32 %v1354, %v1338
      %v1371 = vadd.f32 %v1355, %v1339
      %v1372 = vadd.f32 %v1356, %v1340
      %v1373 = vadd.f32 %v1357, %v1341
      %v1374 = vadd.f32 %v1358, %v1342
      %v1375 = vadd.f32 %v1359, %v1343
      %v1376 = vadd.f32 %v1360, %v1344
      %v1377 = vadd.f32 %v1361, %v1345
      %v1378 = vadd.f32 %v1362, %v1346
      %v1379 = vadd.f32 %v1363, %v1347
      %v1380 = vadd.f32 %v1364, %v1348
      %v1381 = vadd.f32 %v1365, %v1349
      %v1382 = vadd.f32 %v1366, %v1350
      %v1383 = vadd.f32 %v1367, %v1351
      %1384 = vst [vmem:[#allocation4] sm:$0xff] %v1368
      %1385 = vst [vmem:[#allocation4 + $0x8] sm:$0xff] %v1369
      %1386 = vst [vmem:[#allocation4 + $0x10] sm:$0xff] %v1370
      %1387 = vst [vmem:[#allocation4 + $0x18] sm:$0xff] %v1371
      %1388 = vst [vmem:[#allocation4 + $0x20] sm:$0xff] %v1372
      %1389 = vst [vmem:[#allocation4 + $0x28] sm:$0xff] %v1373
      %1390 = vst [vmem:[#allocation4 + $0x30] sm:$0xff] %v1374
      %1391 = vst [vmem:[#allocation4 + $0x38] sm:$0xff] %v1375
      %1392 = vst [vmem:[#allocation4 + $0x40] sm:$0xff] %v1376
      %1393 = vst [vmem:[#allocation4 + $0x48] sm:$0xff] %v1377
      %1394 = vst [vmem:[#allocation4 + $0x50] sm:$0xff] %v1378
      %1395 = vst [vmem:[#allocation4 + $0x58] sm:$0xff] %v1379
      %1396 = vst [vmem:[#allocation4 + $0x60] sm:$0xff] %v1380
      %1397 = vst [vmem:[#allocation4 + $0x68] sm:$0xff] %v1381
      %1398 = vst [vmem:[#allocation4 + $0x70] sm:$0xff] %v1382
      %1399 = vst [vmem:[#allocation4 + $0x78] sm:$0xff] %v1383
      %v1400 = vld [vmem:[#allocation4] sm:$0xff]
      %v1401 = vld [vmem:[#allocation4 + $0x8] sm:$0xff]
      %v1402 = vld [vmem:[#allocation4 + $0x10] sm:$0xff]
      %v1403 = vld [vmem:[#allocation4 + $0x18] sm:$0xff]
      %v1404 = vld [vmem:[#allocation4 + $0x20] sm:$0xff]
      %v1405 = vld [vmem:[#allocation4 + $0x28] sm:$0xff]
      %v1406 = vld [vmem:[#allocation4 + $0x30] sm:$0xff]
      %v1407 = vld [vmem:[#allocation4 + $0x38] sm:$0xff]
      %v1408 = vld [vmem:[#allocation4 + $0x40] sm:$0xff]
      %v1409 = vld [vmem:[#allocation4 + $0x48] sm:$0xff]
      %v1410 = vld [vmem:[#allocation4 + $0x50] sm:$0xff]
      %v1411 = vld [vmem:[#allocation4 + $0x58] sm:$0xff]
      %v1412 = vld [vmem:[#allocation4 + $0x60] sm:$0xff]
      %v1413 = vld [vmem:[#allocation4 + $0x68] sm:$0xff]
      %v1414 = vld [vmem:[#allocation4 + $0x70] sm:$0xff]
      %v1415 = vld [vmem:[#allocation4 + $0x78] sm:$0xff]
      %v1416 = vld [vmem:[%s2] sm:$0xff]
      %v1417 = vld [vmem:[%s2 + $0x8] sm:$0xff]
      %v1418 = vld [vmem:[%s2 + $0x10] sm:$0xff]
      %v1419 = vld [vmem:[%s2 + $0x18] sm:$0xff]
      %v1420 = vld [vmem:[%s2 + $0x20] sm:$0xff]
      %v1421 = vld [vmem:[%s2 + $0x28] sm:$0xff]
      %v1422 = vld [vmem:[%s2 + $0x30] sm:$0xff]
      %v1423 = vld [vmem:[%s2 + $0x38] sm:$0xff]
      %v1424 = vld [vmem:[%s2 + $0x40] sm:$0xff]
      %v1425 = vld [vmem:[%s2 + $0x48] sm:$0xff]
      %v1426 = vld [vmem:[%s2 + $0x50] sm:$0xff]
      %v1427 = vld [vmem:[%s2 + $0x58] sm:$0xff]
      %v1428 = vld [vmem:[%s2 + $0x60] sm:$0xff]
      %v1429 = vld [vmem:[%s2 + $0x68] sm:$0xff]
      %v1430 = vld [vmem:[%s2 + $0x70] sm:$0xff]
      %v1431 = vld [vmem:[%s2 + $0x78] sm:$0xff]
      %1432 = vmatprep.subr.mxu0 0.0
      %1433 = vmatpush1.msra.mxu0 %v1431
      %1434 = vmatprep.subr.mxu0 0.0
      %1435 = vmatpush1.msra.mxu0 %v1430
      %1436 = vmatprep.subr.mxu0 0.0
      %1437 = vmatpush1.msra.mxu0 %v1429
      %1438 = vmatprep.subr.mxu0 0.0
      %1439 = vmatpush1.msra.mxu0 %v1428
      %1440 = vmatprep.subr.mxu0 0.0
      %1441 = vmatpush1.msra.mxu0 %v1427
      %1442 = vmatprep.subr.mxu0 0.0
      %1443 = vmatpush1.msra.mxu0 %v1426
      %1444 = vmatprep.subr.mxu0 0.0
      %1445 = vmatpush1.msra.mxu0 %v1425
      %1446 = vmatprep.subr.mxu0 0.0
      %1447 = vmatpush1.msra.mxu0 %v1424
      %1448 = vmatprep.subr.mxu0 0.0
      %1449 = vmatpush1.msra.mxu0 %v1423
      %1450 = vmatprep.subr.mxu0 0.0
      %1451 = vmatpush1.msra.mxu0 %v1422
      %1452 = vmatprep.subr.mxu0 0.0
      %1453 = vmatpush1.msra.mxu0 %v1421
      %1454 = vmatprep.subr.mxu0 0.0
      %1455 = vmatpush1.msra.mxu0 %v1420
      %1456 = vmatprep.subr.mxu0 0.0
      %1457 = vmatpush1.msra.mxu0 %v1419
      %1458 = vmatprep.subr.mxu0 0.0
      %1459 = vmatpush1.msra.mxu0 %v1418
      %1460 = vmatprep.subr.mxu0 0.0
      %1461 = vmatpush1.msra.mxu0 %v1417
      %1462 = vmatprep.subr.mxu0 0.0
      %1463 = vmatpush1.msra.mxu0 %v1416
      %1464 = vmatprep.subr.mxu0 0.0
      %1465 = vmatpush2.msra.mxu0 0.0
      %1466 = vmatprep.subr.mxu0 0.0
      %1467 = vmatpush2.msra.mxu0 0.0
      %1468 = vmatprep.subr.mxu0 0.0
      %1469 = vmatpush2.msra.mxu0 0.0
      %1470 = vmatprep.subr.mxu0 0.0
      %1471 = vmatpush2.msra.mxu0 0.0
      %1472 = vmatprep.subr.mxu0 0.0
      %1473 = vmatpush2.msra.mxu0 0.0
      %1474 = vmatprep.subr.mxu0 0.0
      %1475 = vmatpush2.msra.mxu0 0.0
      %1476 = vmatprep.subr.mxu0 0.0
      %1477 = vmatpush2.msra.mxu0 0.0
      %1478 = vmatprep.subr.mxu0 0.0
      %1479 = vmatpush2.msra.mxu0 0.0
      %1480 = vmatprep.subr.mxu0 0.0
      %1481 = vmatpush2.msra.mxu0 0.0
      %1482 = vmatprep.subr.mxu0 0.0
      %1483 = vmatpush2.msra.mxu0 0.0
      %1484 = vmatprep.subr.mxu0 0.0
      %1485 = vmatpush2.msra.mxu0 0.0
      %1486 = vmatprep.subr.mxu0 0.0
      %1487 = vmatpush2.msra.mxu0 0.0
      %1488 = vmatprep.subr.mxu0 0.0
      %1489 = vmatpush2.msra.mxu0 0.0
      %1490 = vmatprep.subr.mxu0 0.0
      %1491 = vmatpush2.msra.mxu0 0.0
      %1492 = vmatprep.subr.mxu0 0.0
      %1493 = vmatpush2.msra.mxu0 0.0
      %1494 = vmatprep.subr.mxu0 0.0
      %1495 = vmatpush2.msra.mxu0 0.0
      %1496 = vmatprep.mubr.f32.mxu0 0.0
      %1497 = vmatmul.mubr.f32.gmra.mxu0 %v1400
      %v1498 = vpop.f32.mrf.mxu0
      %v1499 = vadd.f32 0.0, %v1498
      %v1500 = vpop.f32.mrf.mxu0
      %1501 = vmatprep.mubr.f32.mxu0 0.0
      %1502 = vmatmul.mubr.f32.gmra.mxu0 %v1401
      %v1503 = vpop.f32.mrf.mxu0
      %v1504 = vadd.f32 0.0, %v1503
      %v1505 = vpop.f32.mrf.mxu0
      %1506 = vmatprep.mubr.f32.mxu0 0.0
      %1507 = vmatmul.mubr.f32.gmra.mxu0 %v1402
      %v1508 = vpop.f32.mrf.mxu0
      %v1509 = vadd.f32 0.0, %v1508
      %v1510 = vpop.f32.mrf.mxu0
      %1511 = vmatprep.mubr.f32.mxu0 0.0
      %1512 = vmatmul.mubr.f32.gmra.mxu0 %v1403
      %v1513 = vpop.f32.mrf.mxu0
      %v1514 = vadd.f32 0.0, %v1513
      %v1515 = vpop.f32.mrf.mxu0
      %1516 = vmatprep.mubr.f32.mxu0 0.0
      %1517 = vmatmul.mubr.f32.gmra.mxu0 %v1404
      %v1518 = vpop.f32.mrf.mxu0
      %v1519 = vadd.f32 0.0, %v1518
      %v1520 = vpop.f32.mrf.mxu0
      %1521 = vmatprep.mubr.f32.mxu0 0.0
      %1522 = vmatmul.mubr.f32.gmra.mxu0 %v1405
      %v1523 = vpop.f32.mrf.mxu0
      %v1524 = vadd.f32 0.0, %v1523
      %v1525 = vpop.f32.mrf.mxu0
      %1526 = vmatprep.mubr.f32.mxu0 0.0
      %1527 = vmatmul.mubr.f32.gmra.mxu0 %v1406
      %v1528 = vpop.f32.mrf.mxu0
      %v1529 = vadd.f32 0.0, %v1528
      %v1530 = vpop.f32.mrf.mxu0
      %1531 = vmatprep.mubr.f32.mxu0 0.0
      %1532 = vmatmul.mubr.f32.gmra.mxu0 %v1407
      %v1533 = vpop.f32.mrf.mxu0
      %v1534 = vadd.f32 0.0, %v1533
      %v1535 = vpop.f32.mrf.mxu0
      %1536 = vmatprep.mubr.f32.mxu0 0.0
      %1537 = vmatmul.mubr.f32.gmra.mxu0 %v1408
      %v1538 = vpop.f32.mrf.mxu0
      %v1539 = vadd.f32 0.0, %v1538
      %v1540 = vpop.f32.mrf.mxu0
      %1541 = vmatprep.mubr.f32.mxu0 0.0
      %1542 = vmatmul.mubr.f32.gmra.mxu0 %v1409
      %v1543 = vpop.f32.mrf.mxu0
      %v1544 = vadd.f32 0.0, %v1543
      %v1545 = vpop.f32.mrf.mxu0
      %1546 = vmatprep.mubr.f32.mxu0 0.0
      %1547 = vmatmul.mubr.f32.gmra.mxu0 %v1410
      %v1548 = vpop.f32.mrf.mxu0
      %v1549 = vadd.f32 0.0, %v1548
      %v1550 = vpop.f32.mrf.mxu0
      %1551 = vmatprep.mubr.f32.mxu0 0.0
      %1552 = vmatmul.mubr.f32.gmra.mxu0 %v1411
      %v1553 = vpop.f32.mrf.mxu0
      %v1554 = vadd.f32 0.0, %v1553
      %v1555 = vpop.f32.mrf.mxu0
      %1556 = vmatprep.mubr.f32.mxu0 0.0
      %1557 = vmatmul.mubr.f32.gmra.mxu0 %v1412
      %v1558 = vpop.f32.mrf.mxu0
      %v1559 = vadd.f32 0.0, %v1558
      %v1560 = vpop.f32.mrf.mxu0
      %1561 = vmatprep.mubr.f32.mxu0 0.0
      %1562 = vmatmul.mubr.f32.gmra.mxu0 %v1413
      %v1563 = vpop.f32.mrf.mxu0
      %v1564 = vadd.f32 0.0, %v1563
      %v1565 = vpop.f32.mrf.mxu0
      %1566 = vmatprep.mubr.f32.mxu0 0.0
      %1567 = vmatmul.mubr.f32.gmra.mxu0 %v1414
      %v1568 = vpop.f32.mrf.mxu0
      %v1569 = vadd.f32 0.0, %v1568
      %v1570 = vpop.f32.mrf.mxu0
      %1571 = vmatprep.mubr.f32.mxu0 0.0
      %1572 = vmatmul.mubr.f32.gmra.mxu0 %v1415
      %v1573 = vpop.f32.mrf.mxu0
      %v1574 = vadd.f32 0.0, %v1573
      %v1575 = vpop.f32.mrf.mxu0
      %1576 = vdwg.mxu0
      %1577 = vst [vmem:[%s148] sm:$0xff] %v1499
      %1578 = vst [vmem:[%s148 + $0x8] sm:$0xff] %v1504
      %1579 = vst [vmem:[%s148 + $0x10] sm:$0xff] %v1509
      %1580 = vst [vmem:[%s148 + $0x18] sm:$0xff] %v1514
      %1581 = vst [vmem:[%s148 + $0x20] sm:$0xff] %v1519
      %1582 = vst [vmem:[%s148 + $0x28] sm:$0xff] %v1524
      %1583 = vst [vmem:[%s148 + $0x30] sm:$0xff] %v1529
      %1584 = vst [vmem:[%s148 + $0x38] sm:$0xff] %v1534
      %1585 = vst [vmem:[%s148 + $0x40] sm:$0xff] %v1539
      %1586 = vst [vmem:[%s148 + $0x48] sm:$0xff] %v1544
      %1587 = vst [vmem:[%s148 + $0x50] sm:$0xff] %v1549
      %1588 = vst [vmem:[%s148 + $0x58] sm:$0xff] %v1554
      %1589 = vst [vmem:[%s148 + $0x60] sm:$0xff] %v1559
      %1590 = vst [vmem:[%s148 + $0x68] sm:$0xff] %v1564
      %1591 = vst [vmem:[%s148 + $0x70] sm:$0xff] %v1569
      %1592 = vst [vmem:[%s148 + $0x78] sm:$0xff] %v1574
      %s1593 = smul.u32 8, %s19
      %p1594 = scmp.lt.s32.totalorder %s18, 1
      %s1595 = scalar_select %p1594, %s18, 1
      %p1596 = scmp.lt.s32.totalorder %s1593, 15
      %s1597 = scalar_select %p1596, %s1593, 15
      %s1598 = smul.addr %s1597, 2
      %s1599 = smul.addr %s1595, 32
      %s1600 = sadd.s32 %s1598, %s1599
      %s1601 = smul.addr %s1600, 8
      %s1602 = scalar_lea.vmem %s3, %s1601
      // Predicated region
      $region111: #{_lambda_.1} parent=27 // pred_check
        %p1603 = pneg %p88
      $region112: #{_lambda_.1} parent=27 // pred_check_branch
        %1605 = sbr.rel (%p1603) target = $region114
      $region113: #{_lambda_.1} parent=27 // pred_region
        %s1606 = smul.u32 8, %s19
      $region114: #{_lambda_.1} parent=27 // pred_fallthru
        _
    $region28: #{_lambda_.1} parent=5 // pred_fallthru
      _
    %p1607 = scmp.le.s32.totalorder 2, %s9
    // Predicated region
    $region115: #{_lambda_.1} parent=5 // pred_check
      %p1608 = pneg %p1607
    $region116: #{_lambda_.1} parent=5 // pred_check_branch
      %1610 = sbr.rel (%p1608) target = $region118
    $region117: #{_lambda_.1} parent=5 // pred_region
      %s1611 = ssub.s32 %s9, 2
      // Predicated region
      $region119: #{_lambda_.1} parent=117 // pred_check
        %p1612 = pneg %p94
      $region120: #{_lambda_.1} parent=117 // pred_check_branch
        %1614 = sbr.rel (%p1612) target = $region122
      $region121: #{_lambda_.1} parent=117 // pred_region
        %s1615 = smul.u32 8, %s21
        %p1616 = scmp.lt.s32.totalorder %s20, 1
        %s1617 = scalar_select %p1616, %s20, 1
        %p1618 = scmp.lt.s32.totalorder %s1615, 15
        %s1619 = scalar_select %p1618, %s1615, 15
        %s1620 = smul.addr %s1619, 2
        %s1621 = smul.addr %s1617, 32
        %s1622 = sadd.s32 %s1620, %s1621
        %s1623 = smul.addr %s1622, 8
        %s1624 = scalar_lea.vmem %s3, %s1623
      $region122: #{_lambda_.1} parent=117 // pred_fallthru
        _
    $region118: #{_lambda_.1} parent=5 // pred_fallthru
      _
  $region6: #{_lambda_.1} parent=0 // loop_footer
    %s13 = sadd.s32 1, %s9
  $region7: #{_lambda_.1} parent=0 // loop_footer_branch
    %8 = sbr.rel target = $region3
  $region8: #{_lambda_.1} parent=0 // loop_exit
    _
  %1625 = vsyncmov [#allocation3]
  %s1626 = vpop.sfrf %1625
  %p1627 = scmp.eq.s32.totalorder %s1626, 0
  %p1628 = pneg %p1627
  %1630 = shalt.err (%p1628)
  %s1631 = scalar_lea.sflag [#allocation3], 1
  %1632 = vsyncmov %s1631
  %s1633 = vpop.sfrf %1632
  %p1634 = scmp.eq.s32.totalorder %s1633, 0
  %p1635 = pneg %p1634
  %1637 = shalt.err (%p1635)

</llo_original>
